<compile_context>
chip_gen: v7x
topology: tpu7x:2x2x1
jax: 0.10.0
libtpu: 0.0.40
codegen_flags: <defaults>
</compile_context>

<pallas_src>
import functools

import jax
import jax.numpy as jnp
from jax import lax
from jax.experimental import pallas as pl
from jax.experimental.pallas import tpu as pltpu


def _round_up(x, m):
    return ((x + m - 1) // m) * m


# ----------------------------------------------------------------------------
# Kernel 1: fused conv (matmul over im2col patches) + 2x2 max-pool + ReLU
# ----------------------------------------------------------------------------
def _conv_pool_relu_kernel(p_ref, w_ref, b_ref, o_ref):
    """out[m, co] = relu( max_p( patches[p, m, :] @ W[:, co] ) + b[co] )."""
    P, TM, K = p_ref.shape
    # One large MXU matmul instead of 4 small ones, then a VPU max-reduce.
    p = p_ref[...].reshape(P * TM, K)
    acc = jnp.dot(p, w_ref[...], preferred_element_type=jnp.float32)
    acc = jnp.max(acc.reshape(P, TM, -1), axis=0)
    # max(patch @ W) + b == max(conv + b)  (bias constant over the window),
    # and relu(maxpool(.)) == maxpool(relu(.)) since relu is monotone.
    o_ref[...] = jnp.maximum(acc + b_ref[...], 0.0)


def conv_pool_relu(patches, w, b, *, tm=512, compute_dtype=jnp.bfloat16):
    """patches: (4, M, K) f32, w: (K, Cout) f32, b: (1, Cout) f32 -> (M, Cout) f32."""
    P, M, K = patches.shape
    Cout = w.shape[1]

    Kp = _round_up(K, 8)            # 25 -> 32, 250 -> 256
    Cp = _round_up(Cout, 128)       # lane-dense output
    tm = min(tm, _round_up(M, 16))  # sublane-friendly tile, capped by problem size
    Mp = _round_up(M, tm)

    patches_p = jnp.pad(patches, ((0, 0), (0, Mp - M), (0, Kp - K))).astype(compute_dtype)
    w_p = jnp.pad(w, ((0, Kp - K), (0, Cp - Cout))).astype(compute_dtype)
    b_p = jnp.pad(b, ((0, 0), (0, Cp - Cout))).astype(jnp.float32)

    out = pl.pallas_call(
        _conv_pool_relu_kernel,
        out_shape=jax.ShapeDtypeStruct((Mp, Cp), jnp.float32),
        grid=(Mp // tm,),
        in_specs=[
            pl.BlockSpec((P, tm, Kp), lambda i: (0, i, 0)),   # streamed rows
            pl.BlockSpec((Kp, Cp), lambda i: (0, 0)),         # resident weight
            pl.BlockSpec((1, Cp), lambda i: (0, 0)),          # resident bias
        ],
        out_specs=pl.BlockSpec((tm, Cp), lambda i: (i, 0)),
        compiler_params=pltpu.CompilerParams(
            dimension_semantics=("parallel",),
            vmem_limit_bytes=32 * 1024 * 1024,
        ),
    )(patches_p, w_p, b_p)
    return out[:M, :Cout]


# ----------------------------------------------------------------------------
# Kernel 2: fused fc1 -> ReLU -> fc2 -> log_softmax (padded class lanes masked)
# ----------------------------------------------------------------------------
def _mlp_logsoftmax_kernel(x_ref, w1_ref, b1_ref, w2_ref, b2_ref, o_ref, *,
                           num_classes):
    h = jnp.dot(x_ref[...], w1_ref[...],
                preferred_element_type=jnp.float32) + b1_ref[...]
    h = jnp.maximum(h, 0.0).astype(w2_ref.dtype)
    # TODO(synk): F.dropout treated as eval-mode identity (no RNG).
    z = jnp.dot(h, w2_ref[...],
                preferred_element_type=jnp.float32) + b2_ref[...]
    # Mask padded class lanes so they do not corrupt the log-sum-exp.
    col = lax.broadcasted_iota(jnp.int32, z.shape, 1)
    z = jnp.where(col < num_classes, z, -1e30)
    m = jnp.max(z, axis=-1, keepdims=True)
    lse = jnp.log(jnp.sum(jnp.exp(z - m), axis=-1, keepdims=True)) + m
    o_ref[...] = z - lse


def mlp_logsoftmax(x, w1, b1, w2, b2, *, tn=512, compute_dtype=jnp.bfloat16):
    N, D = x.shape
    H = w1.shape[1]
    C = w2.shape[1]

    Hp = _round_up(H, 128)          # lane-dense hidden activation
    Cp = _round_up(C, 128)          # lane-dense logits
    tn = min(tn, _round_up(N, 16))
    Np = _round_up(N, tn)

    x_p = jnp.pad(x, ((0, Np - N), (0, 0))).astype(compute_dtype)
    w1_p = jnp.pad(w1, ((0, 0), (0, Hp - H))).astype(compute_dtype)
    b1_p = jnp.pad(b1, ((0, 0), (0, Hp - H))).astype(jnp.float32)
    w2_p = jnp.pad(w2, ((0, Hp - H), (0, Cp - C))).astype(compute_dtype)
    b2_p = jnp.pad(b2, ((0, 0), (0, Cp - C))).astype(jnp.float32)

    kernel = functools.partial(_mlp_logsoftmax_kernel, num_classes=C)
    out = pl.pallas_call(
        kernel,
        out_shape=jax.ShapeDtypeStruct((Np, Cp), jnp.float32),
        grid=(Np // tn,),
        in_specs=[
            pl.BlockSpec((tn, D), lambda i: (i, 0)),          # streamed activations
            pl.BlockSpec((D, Hp), lambda i: (0, 0)),          # resident fc1 weight
            pl.BlockSpec((1, Hp), lambda i: (0, 0)),
            pl.BlockSpec((Hp, Cp), lambda i: (0, 0)),         # resident fc2 weight
            pl.BlockSpec((1, Cp), lambda i: (0, 0)),
        ],
        out_specs=pl.BlockSpec((tn, Cp), lambda i: (i, 0)),
        compiler_params=pltpu.CompilerParams(
            dimension_semantics=("parallel",),
            vmem_limit_bytes=32 * 1024 * 1024,
        ),
    )(x_p, w1_p, b1_p, w2_p, b2_p)
    return out[:N, :C]


# ----------------------------------------------------------------------------
# Glue: NHWC im2col grouped by 2x2 pooling windows (plain JAX, no compute)
# ----------------------------------------------------------------------------
def _pooled_conv_patches_nhwc(x, k, pool=2):
    """x: (N, H, W, C) -> patches (pool*pool, N*Ho2*Wo2, k*k*C), (Ho2, Wo2).

    K is flattened in (ky, kx, cin) order (cin fastest); rows ordered (n, i, j).
    """
    N, H, W, C = x.shape
    Ho, Wo = H - k + 1, W - k + 1
    cols = []
    for ky in range(k):
        for kx in range(k):
            cols.append(x[:, ky:ky + Ho, kx:kx + Wo, :])       # (N, Ho, Wo, C)
    p = jnp.concatenate(cols, axis=-1)                         # (N, Ho, Wo, k*k*C)
    K = k * k * C
    Ho2, Wo2 = Ho // pool, Wo // pool
    p = p.reshape(N, Ho2, pool, Wo2, pool, K)
    p = p.transpose(2, 4, 0, 1, 3, 5)                          # (pool, pool, N, Ho2, Wo2, K)
    return p.reshape(pool * pool, N * Ho2 * Wo2, K), (Ho2, Wo2)


# ----------------------------------------------------------------------------
# Forward pass (matches Mnist_Net.forward, eval semantics for dropout)
# ----------------------------------------------------------------------------
def mnist_net_forward(x, params):
    """x: (N, 1, 28, 28) NCHW (PyTorch layout) -> (N, 10) log-probabilities."""
    N = x.shape[0]
    x = jnp.transpose(x, (0, 2, 3, 1))                         # NHWC once, up front

    # conv1 (1->10, k=5) -> max_pool2d(2) -> relu
    p1, (h1, w1sp) = _pooled_conv_patches_nhwc(x, 5)           # (4, N*144, 25)
    w1 = params["conv1_w"].transpose(0, 2, 3, 1).reshape(10, -1).T   # (25, 10)
    b1 = params["conv1_b"].reshape(1, 10)
    y1 = conv_pool_relu(p1, w1, b1)                            # (N*144, 10)
    y1 = y1.reshape(N, h1, w1sp, 10)                           # stays NHWC

    # conv2 (10->20, k=5) -> Dropout2d (eval identity) -> max_pool2d(2) -> relu
    p2, (h2, w2sp) = _pooled_conv_patches_nhwc(y1, 5)          # (4, N*16, 250)
    w2 = params["conv2_w"].transpose(0, 2, 3, 1).reshape(20, -1).T   # (250, 20)
    b2 = params["conv2_b"].reshape(1, 20)
    y2 = conv_pool_relu(p2, w2, b2)                            # (N*16, 20)

    # PyTorch's x.view(-1, 320) flattens (C, H, W); our rows are (n, h, w) with
    # C last, so reorder the fc1 weight columns instead of the activations.
    feat = y2.reshape(N, h2 * w2sp * 20)                       # (N, 320), (h,w,c) order
    fc1_w = (params["fc1_w"].reshape(50, 20, h2, w2sp)
             .transpose(0, 2, 3, 1).reshape(50, -1))           # columns -> (h,w,c)

    # fc1 -> relu -> (dropout identity) -> fc2 -> log_softmax(dim=1)
    return mlp_logsoftmax(
        feat,
        fc1_w.T, params["fc1_b"].reshape(1, -1),
        params["fc2_w"].T, params["fc2_b"].reshape(1, -1),
    )


# ----------------------------------------------------------------------------
# Deterministic parameter init (PyTorch-style uniform(-1/sqrt(fan_in), +))
# ----------------------------------------------------------------------------
def init_params(key):
    def uinit(k, shape, fan_in):
        bound = 1.0 / (fan_in ** 0.5)
        return jax.random.uniform(k, shape, jnp.float32, -bound, bound)

    ks = jax.random.split(key, 8)
    return {
        "conv1_w": uinit(ks[0], (10, 1, 5, 5), 1 * 5 * 5),
        "conv1_b": uinit(ks[1], (10,), 1 * 5 * 5),
        "conv2_w": uinit(ks[2], (20, 10, 5, 5), 10 * 5 * 5),
        "conv2_b": uinit(ks[3], (20,), 10 * 5 * 5),
        "fc1_w":  uinit(ks[4], (50, 320), 320),
        "fc1_b":  uinit(ks[5], (50,), 320),
        "fc2_w":  uinit(ks[6], (10, 50), 50),
        "fc2_b":  uinit(ks[7], (10,), 50),
    }


if __name__ == "__main__":
    key = jax.random.PRNGKey(0)
    pkey, xkey = jax.random.split(key)
    params = init_params(pkey)

    # The 320-feature flatten (20 * 4 * 4) requires 28x28 spatial input.
    x = jax.random.normal(xkey, (2, 1, 28, 28), jnp.float32)

    out = jax.jit(mnist_net_forward)(x, params)
    jax.block_until_ready(out)
    assert out.shape == (2, 10)
    assert bool(jnp.all(jnp.isfinite(out)))
    print("KERNEL_OK")
</pallas_src>

<mosaic_0001>
module attributes {stable_mosaic.version = 11 : i64} {
  func.func @_conv_pool_relu_kernel(%arg0: i32, %arg1: memref<4x288x32xbf16, #tpu.memory_space<vmem>>, %arg2: memref<32x128xbf16, #tpu.memory_space<vmem>>, %arg3: memref<1x128xf32, #tpu.memory_space<vmem>>, %arg4: memref<288x128xf32, #tpu.memory_space<vmem>>) attributes {dimension_semantics = [#tpu.dimension_semantics<parallel>], iteration_bounds = array<i64: 1>, scalar_prefetch = 0 : i64, scratch_operands = 0 : i64, tpu.core_type = #tpu.core_type<tc>, window_params = [{transform_indices = @transform_0, window_bounds = array<i64: 4, 288, 32>}, {pipeline_mode = #tpu.pipeline_mode<synchronous>, transform_indices = @transform_1, window_bounds = array<i64: 32, 128>}, {pipeline_mode = #tpu.pipeline_mode<synchronous>, transform_indices = @transform_2, window_bounds = array<i64: 1, 128>}, {transform_indices = @transform_3, window_bounds = array<i64: 288, 128>}]} {
    %c0 = arith.constant 0 : index
    %c0_0 = arith.constant 0 : index
    %c0_1 = arith.constant 0 : index
    %0 = vector.load %arg1[%c0, %c0_0, %c0_1] : memref<4x288x32xbf16, #tpu.memory_space<vmem>>, vector<4x288x32xbf16>
    %1 = vector.shape_cast %0 : vector<4x288x32xbf16> to vector<1152x32xbf16>
    %c0_2 = arith.constant 0 : index
    %c0_3 = arith.constant 0 : index
    %2 = vector.load %arg2[%c0_2, %c0_3] : memref<32x128xbf16, #tpu.memory_space<vmem>>, vector<32x128xbf16>
    %cst = arith.constant dense<0.000000e+00> : vector<1152x128xf32>
    %3 = tpu.matmul %1, %2, %cst {dimension_numbers = #tpu.dot_dimension_numbers<[1], [0], [0], [1], [0, 0, 1, 1], [], []>} : vector<1152x32xbf16>, vector<32x128xbf16>, vector<1152x128xf32> -> vector<1152x128xf32>
    %4 = vector.shape_cast %3 : vector<1152x128xf32> to vector<4x288x128xf32>
    %cst_4 = arith.constant dense<0xFF800000> : vector<288x128xf32>
    %5 = vector.multi_reduction <maximumf>, %4, %cst_4 [0] : vector<4x288x128xf32> to vector<288x128xf32>
    %c0_5 = arith.constant 0 : index
    %c0_6 = arith.constant 0 : index
    %6 = vector.load %arg3[%c0_5, %c0_6] : memref<1x128xf32, #tpu.memory_space<vmem>>, vector<1x128xf32>
    %7 = vector.broadcast %6 : vector<1x128xf32> to vector<288x128xf32>
    %8 = arith.addf %5, %7 : vector<288x128xf32>
    %cst_7 = arith.constant 0.000000e+00 : f32
    %9 = vector.broadcast %cst_7 : f32 to vector<288x128xf32>
    %10 = arith.maximumf %8, %9 : vector<288x128xf32>
    %c0_8 = arith.constant 0 : index
    %c0_9 = arith.constant 0 : index
    %11 = vector.load %arg4[%c0_8, %c0_9] : memref<288x128xf32, #tpu.memory_space<vmem>>, vector<288x128xf32>
    tpu.vector_store %arg4[%c0_8, %c0_9], %10 {strides = array<i32>} : memref<288x128xf32, #tpu.memory_space<vmem>>, vector<288x128xf32>,
    return
  }
  func.func @transform_0(%arg0: i32) -> (i32, i32, i32) {
    %c0_i32 = arith.constant 0 : i32
    %c0_i32_0 = arith.constant 0 : i32
    %c0_i32_1 = arith.constant 0 : i32
    return %c0_i32, %arg0, %c0_i32_0 : i32, i32, i32
  }
  func.func @transform_1(%arg0: i32) -> (i32, i32) {
    %c0_i32 = arith.constant 0 : i32
    %c0_i32_0 = arith.constant 0 : i32
    %c0_i32_1 = arith.constant 0 : i32
    return %c0_i32, %c0_i32_0 : i32, i32
  }
  func.func @transform_2(%arg0: i32) -> (i32, i32) {
    %c0_i32 = arith.constant 0 : i32
    %c0_i32_0 = arith.constant 0 : i32
    %c0_i32_1 = arith.constant 0 : i32
    return %c0_i32, %c0_i32_0 : i32, i32
  }
  func.func @transform_3(%arg0: i32) -> (i32, i32) {
    %c0_i32 = arith.constant 0 : i32
    %c0_i32_0 = arith.constant 0 : i32
    return %arg0, %c0_i32 : i32, i32
  }
}

module attributes {stable_mosaic.version = 11 : i64} {
  func.func @_conv_pool_relu_kernel(%arg0: i32, %arg1: memref<4x32x256xbf16, #tpu.memory_space<vmem>>, %arg2: memref<256x128xbf16, #tpu.memory_space<vmem>>, %arg3: memref<1x128xf32, #tpu.memory_space<vmem>>, %arg4: memref<32x128xf32, #tpu.memory_space<vmem>>) attributes {dimension_semantics = [#tpu.dimension_semantics<parallel>], iteration_bounds = array<i64: 1>, scalar_prefetch = 0 : i64, scratch_operands = 0 : i64, tpu.core_type = #tpu.core_type<tc>, window_params = [{transform_indices = @transform_0, window_bounds = array<i64: 4, 32, 256>}, {pipeline_mode = #tpu.pipeline_mode<synchronous>, transform_indices = @transform_1, window_bounds = array<i64: 256, 128>}, {pipeline_mode = #tpu.pipeline_mode<synchronous>, transform_indices = @transform_2, window_bounds = array<i64: 1, 128>}, {transform_indices = @transform_3, window_bounds = array<i64: 32, 128>}]} {
    %c0 = arith.constant 0 : index
    %c0_0 = arith.constant 0 : index
    %c0_1 = arith.constant 0 : index
    %0 = vector.load %arg1[%c0, %c0_0, %c0_1] : memref<4x32x256xbf16, #tpu.memory_space<vmem>>, vector<4x32x256xbf16>
    %1 = vector.shape_cast %0 : vector<4x32x256xbf16> to vector<128x256xbf16>
    %c0_2 = arith.constant 0 : index
    %c0_3 = arith.constant 0 : index
    %2 = vector.load %arg2[%c0_2, %c0_3] : memref<256x128xbf16, #tpu.memory_space<vmem>>, vector<256x128xbf16>
    %cst = arith.constant dense<0.000000e+00> : vector<128x128xf32>
    %3 = tpu.matmul %1, %2, %cst {dimension_numbers = #tpu.dot_dimension_numbers<[1], [0], [0], [1], [0, 0, 1, 1], [], []>} : vector<128x256xbf16>, vector<256x128xbf16>, vector<128x128xf32> -> vector<128x128xf32>
    %4 = vector.shape_cast %3 : vector<128x128xf32> to vector<4x32x128xf32>
    %cst_4 = arith.constant dense<0xFF800000> : vector<32x128xf32>
    %5 = vector.multi_reduction <maximumf>, %4, %cst_4 [0] : vector<4x32x128xf32> to vector<32x128xf32>
    %c0_5 = arith.constant 0 : index
    %c0_6 = arith.constant 0 : index
    %6 = vector.load %arg3[%c0_5, %c0_6] : memref<1x128xf32, #tpu.memory_space<vmem>>, vector<1x128xf32>
    %7 = vector.broadcast %6 : vector<1x128xf32> to vector<32x128xf32>
    %8 = arith.addf %5, %7 : vector<32x128xf32>
    %cst_7 = arith.constant 0.000000e+00 : f32
    %9 = vector.broadcast %cst_7 : f32 to vector<32x128xf32>
    %10 = arith.maximumf %8, %9 : vector<32x128xf32>
    %c0_8 = arith.constant 0 : index
    %c0_9 = arith.constant 0 : index
    %11 = vector.load %arg4[%c0_8, %c0_9] : memref<32x128xf32, #tpu.memory_space<vmem>>, vector<32x128xf32>
    tpu.vector_store %arg4[%c0_8, %c0_9], %10 {strides = array<i32>} : memref<32x128xf32, #tpu.memory_space<vmem>>, vector<32x128xf32>,
    return
  }
  func.func @transform_0(%arg0: i32) -> (i32, i32, i32) {
    %c0_i32 = arith.constant 0 : i32
    %c0_i32_0 = arith.constant 0 : i32
    %c0_i32_1 = arith.constant 0 : i32
    return %c0_i32, %arg0, %c0_i32_0 : i32, i32, i32
  }
  func.func @transform_1(%arg0: i32) -> (i32, i32) {
    %c0_i32 = arith.constant 0 : i32
    %c0_i32_0 = arith.constant 0 : i32
    %c0_i32_1 = arith.constant 0 : i32
    return %c0_i32, %c0_i32_0 : i32, i32
  }
  func.func @transform_2(%arg0: i32) -> (i32, i32) {
    %c0_i32 = arith.constant 0 : i32
    %c0_i32_0 = arith.constant 0 : i32
    %c0_i32_1 = arith.constant 0 : i32
    return %c0_i32, %c0_i32_0 : i32, i32
  }
  func.func @transform_3(%arg0: i32) -> (i32, i32) {
    %c0_i32 = arith.constant 0 : i32
    %c0_i32_0 = arith.constant 0 : i32
    return %arg0, %c0_i32 : i32, i32
  }
}

module attributes {stable_mosaic.version = 11 : i64} {
  func.func @_mlp_logsoftmax_kernel(%arg0: i32, %arg1: memref<16x320xbf16, #tpu.memory_space<vmem>>, %arg2: memref<320x128xbf16, #tpu.memory_space<vmem>>, %arg3: memref<1x128xf32, #tpu.memory_space<vmem>>, %arg4: memref<128x128xbf16, #tpu.memory_space<vmem>>, %arg5: memref<1x128xf32, #tpu.memory_space<vmem>>, %arg6: memref<16x128xf32, #tpu.memory_space<vmem>>) attributes {dimension_semantics = [#tpu.dimension_semantics<parallel>], iteration_bounds = array<i64: 1>, scalar_prefetch = 0 : i64, scratch_operands = 0 : i64, tpu.core_type = #tpu.core_type<tc>, window_params = [{transform_indices = @transform_0, window_bounds = array<i64: 16, 320>}, {pipeline_mode = #tpu.pipeline_mode<synchronous>, transform_indices = @transform_1, window_bounds = array<i64: 320, 128>}, {pipeline_mode = #tpu.pipeline_mode<synchronous>, transform_indices = @transform_2, window_bounds = array<i64: 1, 128>}, {pipeline_mode = #tpu.pipeline_mode<synchronous>, transform_indices = @transform_3, window_bounds = array<i64: 128, 128>}, {pipeline_mode = #tpu.pipeline_mode<synchronous>, transform_indices = @transform_4, window_bounds = array<i64: 1, 128>}, {transform_indices = @transform_5, window_bounds = array<i64: 16, 128>}]} {
    %c0 = arith.constant 0 : index
    %c0_0 = arith.constant 0 : index
    %0 = vector.load %arg1[%c0, %c0_0] : memref<16x320xbf16, #tpu.memory_space<vmem>>, vector<16x320xbf16>
    %c0_1 = arith.constant 0 : index
    %c0_2 = arith.constant 0 : index
    %1 = vector.load %arg2[%c0_1, %c0_2] : memref<320x128xbf16, #tpu.memory_space<vmem>>, vector<320x128xbf16>
    %cst = arith.constant dense<0.000000e+00> : vector<16x128xf32>
    %2 = tpu.matmul %0, %1, %cst {dimension_numbers = #tpu.dot_dimension_numbers<[1], [0], [0], [1], [0, 0, 1, 1], [], []>} : vector<16x320xbf16>, vector<320x128xbf16>, vector<16x128xf32> -> vector<16x128xf32>
    %c0_3 = arith.constant 0 : index
    %c0_4 = arith.constant 0 : index
    %3 = vector.load %arg3[%c0_3, %c0_4] : memref<1x128xf32, #tpu.memory_space<vmem>>, vector<1x128xf32>
    %4 = vector.broadcast %3 : vector<1x128xf32> to vector<16x128xf32>
    %5 = arith.addf %2, %4 : vector<16x128xf32>
    %cst_5 = arith.constant 0.000000e+00 : f32
    %6 = vector.broadcast %cst_5 : f32 to vector<16x128xf32>
    %7 = arith.maximumf %5, %6 : vector<16x128xf32>
    %8 = arith.truncf %7 : vector<16x128xf32> to vector<16x128xbf16>
    %c0_6 = arith.constant 0 : index
    %c0_7 = arith.constant 0 : index
    %9 = vector.load %arg4[%c0_6, %c0_7] : memref<128x128xbf16, #tpu.memory_space<vmem>>, vector<128x128xbf16>
    %cst_8 = arith.constant dense<0.000000e+00> : vector<16x128xf32>
    %10 = tpu.matmul %8, %9, %cst_8 {dimension_numbers = #tpu.dot_dimension_numbers<[1], [0], [0], [1], [0, 0, 1, 1], [], []>} : vector<16x128xbf16>, vector<128x128xbf16>, vector<16x128xf32> -> vector<16x128xf32>
    %c0_9 = arith.constant 0 : index
    %c0_10 = arith.constant 0 : index
    %11 = vector.load %arg5[%c0_9, %c0_10] : memref<1x128xf32, #tpu.memory_space<vmem>>, vector<1x128xf32>
    %12 = vector.broadcast %11 : vector<1x128xf32> to vector<16x128xf32>
    %13 = arith.addf %10, %12 : vector<16x128xf32>
    %14 = tpu.iota {dimensions = array<i32: 1>} : vector<16x128xi32>
    %c10_i32 = arith.constant 10 : i32
    %15 = vector.broadcast %c10_i32 : i32 to vector<16x128xi32>
    %16 = arith.cmpi slt, %14, %15 : vector<16x128xi32>
    %cst_11 = arith.constant -1.000000e+30 : f32
    %17 = vector.broadcast %cst_11 : f32 to vector<16x128xf32>
    %18 = arith.select %16, %13, %17 : vector<16x128xi1>, vector<16x128xf32>
    %cst_12 = arith.constant dense<0xFF800000> : vector<16xf32>
    %19 = vector.multi_reduction <maximumf>, %18, %cst_12 [1] : vector<16x128xf32> to vector<16xf32>
    %20 = vector.shape_cast %19 : vector<16xf32> to vector<16x1xf32>
    %21 = vector.broadcast %20 : vector<16x1xf32> to vector<16x128xf32>
    %22 = arith.subf %18, %21 : vector<16x128xf32>
    %23 = math.exp %22 : vector<16x128xf32>
    %cst_13 = arith.constant dense<0.000000e+00> : vector<16xf32>
    %24 = vector.multi_reduction <add>, %23, %cst_13 [1] : vector<16x128xf32> to vector<16xf32>
    %25 = vector.shape_cast %24 : vector<16xf32> to vector<16x1xf32>
    %26 = math.log %25 : vector<16x1xf32>
    %27 = arith.addf %26, %20 : vector<16x1xf32>
    %28 = vector.broadcast %27 : vector<16x1xf32> to vector<16x128xf32>
    %29 = arith.subf %18, %28 : vector<16x128xf32>
    %c0_14 = arith.constant 0 : index
    %c0_15 = arith.constant 0 : index
    %30 = vector.load %arg6[%c0_14, %c0_15] : memref<16x128xf32, #tpu.memory_space<vmem>>, vector<16x128xf32>
    tpu.vector_store %arg6[%c0_14, %c0_15], %29 {strides = array<i32>} : memref<16x128xf32, #tpu.memory_space<vmem>>, vector<16x128xf32>,
    return
  }
  func.func @transform_0(%arg0: i32) -> (i32, i32) {
    %c0_i32 = arith.constant 0 : i32
    %c0_i32_0 = arith.constant 0 : i32
    return %arg0, %c0_i32 : i32, i32
  }
  func.func @transform_1(%arg0: i32) -> (i32, i32) {
    %c0_i32 = arith.constant 0 : i32
    %c0_i32_0 = arith.constant 0 : i32
    %c0_i32_1 = arith.constant 0 : i32
    return %c0_i32, %c0_i32_0 : i32, i32
  }
  func.func @transform_2(%arg0: i32) -> (i32, i32) {
    %c0_i32 = arith.constant 0 : i32
    %c0_i32_0 = arith.constant 0 : i32
    %c0_i32_1 = arith.constant 0 : i32
    return %c0_i32, %c0_i32_0 : i32, i32
  }
  func.func @transform_3(%arg0: i32) -> (i32, i32) {
    %c0_i32 = arith.constant 0 : i32
    %c0_i32_0 = arith.constant 0 : i32
    %c0_i32_1 = arith.constant 0 : i32
    return %c0_i32, %c0_i32_0 : i32, i32
  }
  func.func @transform_4(%arg0: i32) -> (i32, i32) {
    %c0_i32 = arith.constant 0 : i32
    %c0_i32_0 = arith.constant 0 : i32
    %c0_i32_1 = arith.constant 0 : i32
    return %c0_i32, %c0_i32_0 : i32, i32
  }
  func.func @transform_5(%arg0: i32) -> (i32, i32) {
    %c0_i32 = arith.constant 0 : i32
    %c0_i32_0 = arith.constant 0 : i32
    return %arg0, %c0_i32 : i32, i32
  }
}

</mosaic_0001>

<llo_original>
// kernel: mnist_net_forward.3
$region0: #{mnist_net_forward.3}
  #allocation0 [shape = 'u32[]', space=smem, size = 0x4, offset = 0x4, fixed_abs, tag = 'smem constant byte address 0x4 - core index']
  #allocation1 [shape = 'u32[144,128]{1,0:T(1,128)}', space=vmem, size = 0x12000, scoped, tag = 'internal scratch']
  %s0 = inlined_call_operand.vmem [shape: bf16[4,288,32], index: 0, kind: input, shape index: {}]
  %s1 = inlined_call_operand.vmem [shape: bf16[32,128], index: 1, kind: input, shape index: {}]
  %s2 = inlined_call_operand.vmem [shape: f32[1,128], index: 2, kind: input, shape index: {}]
  %s3 = inlined_call_operand.vmem [shape: f32[288,128], index: 3, kind: output, shape index: {}]
  %s4 = sld [smem:[#allocation0]]
  $region22: #{mnist_net_forward.3} parent=0
    _
  %s6 = ssub.s32 1, %s4
  %s7 = scalar_select 0, %s6, %s4
  // Predicated region
  $region2: #{mnist_net_forward.3} parent=0 // pred_check
    _
  $region3: #{mnist_net_forward.3} parent=0 // pred_check_branch
    %9 = sbr.rel (0) target = $region5
  $region4: #{mnist_net_forward.3} parent=0 // pred_region
    _
  $region5: #{mnist_net_forward.3} parent=0 // pred_fallthru
    _
  // Predicated region
  $region6: #{mnist_net_forward.3} parent=0 // pred_check
    _
  $region7: #{mnist_net_forward.3} parent=0 // pred_check_branch
    %11 = sbr.rel (0) target = $region9
  $region8: #{mnist_net_forward.3} parent=0 // pred_region
    _
  $region9: #{mnist_net_forward.3} parent=0 // pred_fallthru
    _
  // Predicated region
  $region10: #{mnist_net_forward.3} parent=0 // pred_check
    _
  $region11: #{mnist_net_forward.3} parent=0 // pred_check_branch
    %13 = sbr.rel (0) target = $region13
  $region12: #{mnist_net_forward.3} parent=0 // pred_region
    _
  $region13: #{mnist_net_forward.3} parent=0 // pred_fallthru
    _
  %v15 = vld [vmem:[%s0] sm:$0xf]
  %v16 = vld [vmem:[%s0 + $0x4] sm:$0xf]
  %v17 = vld [vmem:[%s0 + $0x8] sm:$0xf]
  %v18 = vld [vmem:[%s0 + $0xc] sm:$0xf]
  %v19 = vld [vmem:[%s0 + $0x10] sm:$0xf]
  %v20 = vld [vmem:[%s0 + $0x14] sm:$0xf]
  %v21 = vld [vmem:[%s0 + $0x18] sm:$0xf]
  %v22 = vld [vmem:[%s0 + $0x1c] sm:$0xf]
  %v23 = vld [vmem:[%s0 + $0x20] sm:$0xf]
  %v24 = vld [vmem:[%s0 + $0x24] sm:$0xf]
  %v25 = vld [vmem:[%s0 + $0x28] sm:$0xf]
  %v26 = vld [vmem:[%s0 + $0x2c] sm:$0xf]
  %v27 = vld [vmem:[%s0 + $0x30] sm:$0xf]
  %v28 = vld [vmem:[%s0 + $0x34] sm:$0xf]
  %v29 = vld [vmem:[%s0 + $0x38] sm:$0xf]
  %v30 = vld [vmem:[%s0 + $0x3c] sm:$0xf]
  %v31 = vld [vmem:[%s0 + $0x40] sm:$0xf]
  %v32 = vld [vmem:[%s0 + $0x44] sm:$0xf]
  %v33 = vld [vmem:[%s0 + $0x48] sm:$0xf]
  %v34 = vld [vmem:[%s0 + $0x4c] sm:$0xf]
  %v35 = vld [vmem:[%s0 + $0x50] sm:$0xf]
  %v36 = vld [vmem:[%s0 + $0x54] sm:$0xf]
  %v37 = vld [vmem:[%s0 + $0x58] sm:$0xf]
  %v38 = vld [vmem:[%s0 + $0x5c] sm:$0xf]
  %v39 = vld [vmem:[%s0 + $0x60] sm:$0xf]
  %v40 = vld [vmem:[%s0 + $0x64] sm:$0xf]
  %v41 = vld [vmem:[%s0 + $0x68] sm:$0xf]
  %v42 = vld [vmem:[%s0 + $0x6c] sm:$0xf]
  %v43 = vld [vmem:[%s0 + $0x70] sm:$0xf]
  %v44 = vld [vmem:[%s0 + $0x74] sm:$0xf]
  %v45 = vld [vmem:[%s0 + $0x78] sm:$0xf]
  %v46 = vld [vmem:[%s0 + $0x7c] sm:$0xf]
  %v47 = vld [vmem:[%s0 + $0x80] sm:$0xf]
  %v48 = vld [vmem:[%s0 + $0x84] sm:$0xf]
  %v49 = vld [vmem:[%s0 + $0x88] sm:$0xf]
  %v50 = vld [vmem:[%s0 + $0x8c] sm:$0xf]
  %v51 = vld [vmem:[%s0 + $0x90] sm:$0xf]
  %v52 = vld [vmem:[%s0 + $0x94] sm:$0xf]
  %v53 = vld [vmem:[%s0 + $0x98] sm:$0xf]
  %v54 = vld [vmem:[%s0 + $0x9c] sm:$0xf]
  %v55 = vld [vmem:[%s0 + $0xa0] sm:$0xf]
  %v56 = vld [vmem:[%s0 + $0xa4] sm:$0xf]
  %v57 = vld [vmem:[%s0 + $0xa8] sm:$0xf]
  %v58 = vld [vmem:[%s0 + $0xac] sm:$0xf]
  %v59 = vld [vmem:[%s0 + $0xb0] sm:$0xf]
  %v60 = vld [vmem:[%s0 + $0xb4] sm:$0xf]
  %v61 = vld [vmem:[%s0 + $0xb8] sm:$0xf]
  %v62 = vld [vmem:[%s0 + $0xbc] sm:$0xf]
  %v63 = vld [vmem:[%s0 + $0xc0] sm:$0xf]
  %v64 = vld [vmem:[%s0 + $0xc4] sm:$0xf]
  %v65 = vld [vmem:[%s0 + $0xc8] sm:$0xf]
  %v66 = vld [vmem:[%s0 + $0xcc] sm:$0xf]
  %v67 = vld [vmem:[%s0 + $0xd0] sm:$0xf]
  %v68 = vld [vmem:[%s0 + $0xd4] sm:$0xf]
  %v69 = vld [vmem:[%s0 + $0xd8] sm:$0xf]
  %v70 = vld [vmem:[%s0 + $0xdc] sm:$0xf]
  %v71 = vld [vmem:[%s0 + $0xe0] sm:$0xf]
  %v72 = vld [vmem:[%s0 + $0xe4] sm:$0xf]
  %v73 = vld [vmem:[%s0 + $0xe8] sm:$0xf]
  %v74 = vld [vmem:[%s0 + $0xec] sm:$0xf]
  %v75 = vld [vmem:[%s0 + $0xf0] sm:$0xf]
  %v76 = vld [vmem:[%s0 + $0xf4] sm:$0xf]
  %v77 = vld [vmem:[%s0 + $0xf8] sm:$0xf]
  %v78 = vld [vmem:[%s0 + $0xfc] sm:$0xf]
  %v79 = vld [vmem:[%s0 + $0x100] sm:$0xf]
  %v80 = vld [vmem:[%s0 + $0x104] sm:$0xf]
  %v81 = vld [vmem:[%s0 + $0x108] sm:$0xf]
  %v82 = vld [vmem:[%s0 + $0x10c] sm:$0xf]
  %v83 = vld [vmem:[%s0 + $0x110] sm:$0xf]
  %v84 = vld [vmem:[%s0 + $0x114] sm:$0xf]
  %v85 = vld [vmem:[%s0 + $0x118] sm:$0xf]
  %v86 = vld [vmem:[%s0 + $0x11c] sm:$0xf]
  %v87 = vld [vmem:[%s0 + $0x120] sm:$0xf]
  %v88 = vld [vmem:[%s0 + $0x124] sm:$0xf]
  %v89 = vld [vmem:[%s0 + $0x128] sm:$0xf]
  %v90 = vld [vmem:[%s0 + $0x12c] sm:$0xf]
  %v91 = vld [vmem:[%s0 + $0x130] sm:$0xf]
  %v92 = vld [vmem:[%s0 + $0x134] sm:$0xf]
  %v93 = vld [vmem:[%s0 + $0x138] sm:$0xf]
  %v94 = vld [vmem:[%s0 + $0x13c] sm:$0xf]
  %v95 = vld [vmem:[%s0 + $0x140] sm:$0xf]
  %v96 = vld [vmem:[%s0 + $0x144] sm:$0xf]
  %v97 = vld [vmem:[%s0 + $0x148] sm:$0xf]
  %v98 = vld [vmem:[%s0 + $0x14c] sm:$0xf]
  %v99 = vld [vmem:[%s0 + $0x150] sm:$0xf]
  %v100 = vld [vmem:[%s0 + $0x154] sm:$0xf]
  %v101 = vld [vmem:[%s0 + $0x158] sm:$0xf]
  %v102 = vld [vmem:[%s0 + $0x15c] sm:$0xf]
  %v103 = vld [vmem:[%s0 + $0x160] sm:$0xf]
  %v104 = vld [vmem:[%s0 + $0x164] sm:$0xf]
  %v105 = vld [vmem:[%s0 + $0x168] sm:$0xf]
  %v106 = vld [vmem:[%s0 + $0x16c] sm:$0xf]
  %v107 = vld [vmem:[%s0 + $0x170] sm:$0xf]
  %v108 = vld [vmem:[%s0 + $0x174] sm:$0xf]
  %v109 = vld [vmem:[%s0 + $0x178] sm:$0xf]
  %v110 = vld [vmem:[%s0 + $0x17c] sm:$0xf]
  %v111 = vld [vmem:[%s0 + $0x180] sm:$0xf]
  %v112 = vld [vmem:[%s0 + $0x184] sm:$0xf]
  %v113 = vld [vmem:[%s0 + $0x188] sm:$0xf]
  %v114 = vld [vmem:[%s0 + $0x18c] sm:$0xf]
  %v115 = vld [vmem:[%s0 + $0x190] sm:$0xf]
  %v116 = vld [vmem:[%s0 + $0x194] sm:$0xf]
  %v117 = vld [vmem:[%s0 + $0x198] sm:$0xf]
  %v118 = vld [vmem:[%s0 + $0x19c] sm:$0xf]
  %v119 = vld [vmem:[%s0 + $0x1a0] sm:$0xf]
  %v120 = vld [vmem:[%s0 + $0x1a4] sm:$0xf]
  %v121 = vld [vmem:[%s0 + $0x1a8] sm:$0xf]
  %v122 = vld [vmem:[%s0 + $0x1ac] sm:$0xf]
  %v123 = vld [vmem:[%s0 + $0x1b0] sm:$0xf]
  %v124 = vld [vmem:[%s0 + $0x1b4] sm:$0xf]
  %v125 = vld [vmem:[%s0 + $0x1b8] sm:$0xf]
  %v126 = vld [vmem:[%s0 + $0x1bc] sm:$0xf]
  %v127 = vld [vmem:[%s0 + $0x1c0] sm:$0xf]
  %v128 = vld [vmem:[%s0 + $0x1c4] sm:$0xf]
  %v129 = vld [vmem:[%s0 + $0x1c8] sm:$0xf]
  %v130 = vld [vmem:[%s0 + $0x1cc] sm:$0xf]
  %v131 = vld [vmem:[%s0 + $0x1d0] sm:$0xf]
  %v132 = vld [vmem:[%s0 + $0x1d4] sm:$0xf]
  %v133 = vld [vmem:[%s0 + $0x1d8] sm:$0xf]
  %v134 = vld [vmem:[%s0 + $0x1dc] sm:$0xf]
  %v135 = vld [vmem:[%s0 + $0x1e0] sm:$0xf]
  %v136 = vld [vmem:[%s0 + $0x1e4] sm:$0xf]
  %v137 = vld [vmem:[%s0 + $0x1e8] sm:$0xf]
  %v138 = vld [vmem:[%s0 + $0x1ec] sm:$0xf]
  %v139 = vld [vmem:[%s0 + $0x1f0] sm:$0xf]
  %v140 = vld [vmem:[%s0 + $0x1f4] sm:$0xf]
  %v141 = vld [vmem:[%s0 + $0x1f8] sm:$0xf]
  %v142 = vld [vmem:[%s0 + $0x1fc] sm:$0xf]
  %v143 = vld [vmem:[%s0 + $0x200] sm:$0xf]
  %v144 = vld [vmem:[%s0 + $0x204] sm:$0xf]
  %v145 = vld [vmem:[%s0 + $0x208] sm:$0xf]
  %v146 = vld [vmem:[%s0 + $0x20c] sm:$0xf]
  %v147 = vld [vmem:[%s0 + $0x210] sm:$0xf]
  %v148 = vld [vmem:[%s0 + $0x214] sm:$0xf]
  %v149 = vld [vmem:[%s0 + $0x218] sm:$0xf]
  %v150 = vld [vmem:[%s0 + $0x21c] sm:$0xf]
  %v151 = vld [vmem:[%s0 + $0x220] sm:$0xf]
  %v152 = vld [vmem:[%s0 + $0x224] sm:$0xf]
  %v153 = vld [vmem:[%s0 + $0x228] sm:$0xf]
  %v154 = vld [vmem:[%s0 + $0x22c] sm:$0xf]
  %v155 = vld [vmem:[%s0 + $0x230] sm:$0xf]
  %v156 = vld [vmem:[%s0 + $0x234] sm:$0xf]
  %v157 = vld [vmem:[%s0 + $0x238] sm:$0xf]
  %v158 = vld [vmem:[%s0 + $0x23c] sm:$0xf]
  %v159 = vld [vmem:[%s1] sm:$0xf]
  %v160 = vld [vmem:[%s1 + $0x4] sm:$0xf]
  %v161 = vld [vmem:[%s1 + $0x8] sm:$0xf]
  %v162 = vld [vmem:[%s1 + $0xc] sm:$0xf]
  %v307 = vunpack.c.l.b16 %v15
  %v308 = vunpack.c.l.b16 %v16
  %v309 = vunpack.c.l.b16 %v17
  %v310 = vunpack.c.l.b16 %v18
  %v311 = vunpack.c.l.b16 %v19
  %v312 = vunpack.c.l.b16 %v20
  %v313 = vunpack.c.l.b16 %v21
  %v314 = vunpack.c.l.b16 %v22
  %v315 = vunpack.c.l.b16 %v23
  %v316 = vunpack.c.l.b16 %v24
  %v317 = vunpack.c.l.b16 %v25
  %v318 = vunpack.c.l.b16 %v26
  %v319 = vunpack.c.l.b16 %v27
  %v320 = vunpack.c.l.b16 %v28
  %v321 = vunpack.c.l.b16 %v29
  %v322 = vunpack.c.l.b16 %v30
  %v323 = vunpack.c.l.b16 %v31
  %v324 = vunpack.c.l.b16 %v32
  %v325 = vunpack.c.l.b16 %v33
  %v326 = vunpack.c.l.b16 %v34
  %v327 = vunpack.c.l.b16 %v35
  %v328 = vunpack.c.l.b16 %v36
  %v329 = vunpack.c.l.b16 %v37
  %v330 = vunpack.c.l.b16 %v38
  %v331 = vunpack.c.l.b16 %v39
  %v332 = vunpack.c.l.b16 %v40
  %v333 = vunpack.c.l.b16 %v41
  %v334 = vunpack.c.l.b16 %v42
  %v335 = vunpack.c.l.b16 %v43
  %v336 = vunpack.c.l.b16 %v44
  %v337 = vunpack.c.l.b16 %v45
  %v338 = vunpack.c.l.b16 %v46
  %v339 = vunpack.c.l.b16 %v47
  %v340 = vunpack.c.l.b16 %v48
  %v341 = vunpack.c.l.b16 %v49
  %v342 = vunpack.c.l.b16 %v50
  %v343 = vunpack.c.l.b16 %v51
  %v344 = vunpack.c.l.b16 %v52
  %v345 = vunpack.c.l.b16 %v53
  %v346 = vunpack.c.l.b16 %v54
  %v347 = vunpack.c.l.b16 %v55
  %v348 = vunpack.c.l.b16 %v56
  %v349 = vunpack.c.l.b16 %v57
  %v350 = vunpack.c.l.b16 %v58
  %v351 = vunpack.c.l.b16 %v59
  %v352 = vunpack.c.l.b16 %v60
  %v353 = vunpack.c.l.b16 %v61
  %v354 = vunpack.c.l.b16 %v62
  %v355 = vunpack.c.l.b16 %v63
  %v356 = vunpack.c.l.b16 %v64
  %v357 = vunpack.c.l.b16 %v65
  %v358 = vunpack.c.l.b16 %v66
  %v359 = vunpack.c.l.b16 %v67
  %v360 = vunpack.c.l.b16 %v68
  %v361 = vunpack.c.l.b16 %v69
  %v362 = vunpack.c.l.b16 %v70
  %v363 = vunpack.c.l.b16 %v71
  %v364 = vunpack.c.l.b16 %v72
  %v365 = vunpack.c.l.b16 %v73
  %v366 = vunpack.c.l.b16 %v74
  %v367 = vunpack.c.l.b16 %v75
  %v368 = vunpack.c.l.b16 %v76
  %v369 = vunpack.c.l.b16 %v77
  %v370 = vunpack.c.l.b16 %v78
  %v371 = vunpack.c.l.b16 %v79
  %v372 = vunpack.c.l.b16 %v80
  %v373 = vunpack.c.l.b16 %v81
  %v374 = vunpack.c.l.b16 %v82
  %v375 = vunpack.c.l.b16 %v83
  %v376 = vunpack.c.l.b16 %v84
  %v377 = vunpack.c.l.b16 %v85
  %v378 = vunpack.c.l.b16 %v86
  %v379 = vunpack.c.l.b16 %v87
  %v380 = vunpack.c.l.b16 %v88
  %v381 = vunpack.c.l.b16 %v89
  %v382 = vunpack.c.l.b16 %v90
  %v383 = vunpack.c.l.b16 %v91
  %v384 = vunpack.c.l.b16 %v92
  %v385 = vunpack.c.l.b16 %v93
  %v386 = vunpack.c.l.b16 %v94
  %v387 = vunpack.c.l.b16 %v95
  %v388 = vunpack.c.l.b16 %v96
  %v389 = vunpack.c.l.b16 %v97
  %v390 = vunpack.c.l.b16 %v98
  %v391 = vunpack.c.l.b16 %v99
  %v392 = vunpack.c.l.b16 %v100
  %v393 = vunpack.c.l.b16 %v101
  %v394 = vunpack.c.l.b16 %v102
  %v395 = vunpack.c.l.b16 %v103
  %v396 = vunpack.c.l.b16 %v104
  %v397 = vunpack.c.l.b16 %v105
  %v398 = vunpack.c.l.b16 %v106
  %v399 = vunpack.c.l.b16 %v107
  %v400 = vunpack.c.l.b16 %v108
  %v401 = vunpack.c.l.b16 %v109
  %v402 = vunpack.c.l.b16 %v110
  %v403 = vunpack.c.l.b16 %v111
  %v404 = vunpack.c.l.b16 %v112
  %v405 = vunpack.c.l.b16 %v113
  %v406 = vunpack.c.l.b16 %v114
  %v407 = vunpack.c.l.b16 %v115
  %v408 = vunpack.c.l.b16 %v116
  %v409 = vunpack.c.l.b16 %v117
  %v410 = vunpack.c.l.b16 %v118
  %v411 = vunpack.c.l.b16 %v119
  %v412 = vunpack.c.l.b16 %v120
  %v413 = vunpack.c.l.b16 %v121
  %v414 = vunpack.c.l.b16 %v122
  %v415 = vunpack.c.l.b16 %v123
  %v416 = vunpack.c.l.b16 %v124
  %v417 = vunpack.c.l.b16 %v125
  %v418 = vunpack.c.l.b16 %v126
  %v419 = vunpack.c.l.b16 %v127
  %v420 = vunpack.c.l.b16 %v128
  %v421 = vunpack.c.l.b16 %v129
  %v422 = vunpack.c.l.b16 %v130
  %v423 = vunpack.c.l.b16 %v131
  %v424 = vunpack.c.l.b16 %v132
  %v425 = vunpack.c.l.b16 %v133
  %v426 = vunpack.c.l.b16 %v134
  %v427 = vunpack.c.l.b16 %v135
  %v428 = vunpack.c.l.b16 %v136
  %v429 = vunpack.c.l.b16 %v137
  %v430 = vunpack.c.l.b16 %v138
  %v431 = vunpack.c.l.b16 %v139
  %v432 = vunpack.c.l.b16 %v140
  %v433 = vunpack.c.l.b16 %v141
  %v434 = vunpack.c.l.b16 %v142
  %v435 = vunpack.c.l.b16 %v143
  %v436 = vunpack.c.l.b16 %v144
  %v437 = vunpack.c.l.b16 %v145
  %v438 = vunpack.c.l.b16 %v146
  %v439 = vunpack.c.l.b16 %v147
  %v440 = vunpack.c.l.b16 %v148
  %v441 = vunpack.c.l.b16 %v149
  %v442 = vunpack.c.l.b16 %v150
  %v443 = vunpack.c.l.b16 %v151
  %v444 = vunpack.c.l.b16 %v152
  %v445 = vunpack.c.l.b16 %v153
  %v446 = vunpack.c.l.b16 %v154
  %v447 = vunpack.c.l.b16 %v155
  %v448 = vunpack.c.l.b16 %v156
  %v449 = vunpack.c.l.b16 %v157
  %v450 = vunpack.c.l.b16 %v158
  %v451 = vpack.c.b16 %v308, %v307
  %v452 = vpack.c.b16 %v310, %v309
  %v453 = vpack.c.b16 %v312, %v311
  %v454 = vpack.c.b16 %v314, %v313
  %v455 = vpack.c.b16 %v316, %v315
  %v456 = vpack.c.b16 %v318, %v317
  %v457 = vpack.c.b16 %v320, %v319
  %v458 = vpack.c.b16 %v322, %v321
  %v459 = vpack.c.b16 %v324, %v323
  %v460 = vpack.c.b16 %v326, %v325
  %v461 = vpack.c.b16 %v328, %v327
  %v462 = vpack.c.b16 %v330, %v329
  %v463 = vpack.c.b16 %v332, %v331
  %v464 = vpack.c.b16 %v334, %v333
  %v465 = vpack.c.b16 %v336, %v335
  %v466 = vpack.c.b16 %v338, %v337
  %v467 = vpack.c.b16 %v340, %v339
  %v468 = vpack.c.b16 %v342, %v341
  %v469 = vpack.c.b16 %v344, %v343
  %v470 = vpack.c.b16 %v346, %v345
  %v471 = vpack.c.b16 %v348, %v347
  %v472 = vpack.c.b16 %v350, %v349
  %v473 = vpack.c.b16 %v352, %v351
  %v474 = vpack.c.b16 %v354, %v353
  %v475 = vpack.c.b16 %v356, %v355
  %v476 = vpack.c.b16 %v358, %v357
  %v477 = vpack.c.b16 %v360, %v359
  %v478 = vpack.c.b16 %v362, %v361
  %v479 = vpack.c.b16 %v364, %v363
  %v480 = vpack.c.b16 %v366, %v365
  %v481 = vpack.c.b16 %v368, %v367
  %v482 = vpack.c.b16 %v370, %v369
  %v483 = vpack.c.b16 %v372, %v371
  %v484 = vpack.c.b16 %v374, %v373
  %v485 = vpack.c.b16 %v376, %v375
  %v486 = vpack.c.b16 %v378, %v377
  %v487 = vpack.c.b16 %v380, %v379
  %v488 = vpack.c.b16 %v382, %v381
  %v489 = vpack.c.b16 %v384, %v383
  %v490 = vpack.c.b16 %v386, %v385
  %v491 = vpack.c.b16 %v388, %v387
  %v492 = vpack.c.b16 %v390, %v389
  %v493 = vpack.c.b16 %v392, %v391
  %v494 = vpack.c.b16 %v394, %v393
  %v495 = vpack.c.b16 %v396, %v395
  %v496 = vpack.c.b16 %v398, %v397
  %v497 = vpack.c.b16 %v400, %v399
  %v498 = vpack.c.b16 %v402, %v401
  %v499 = vpack.c.b16 %v404, %v403
  %v500 = vpack.c.b16 %v406, %v405
  %v501 = vpack.c.b16 %v408, %v407
  %v502 = vpack.c.b16 %v410, %v409
  %v503 = vpack.c.b16 %v412, %v411
  %v504 = vpack.c.b16 %v414, %v413
  %v505 = vpack.c.b16 %v416, %v415
  %v506 = vpack.c.b16 %v418, %v417
  %v507 = vpack.c.b16 %v420, %v419
  %v508 = vpack.c.b16 %v422, %v421
  %v509 = vpack.c.b16 %v424, %v423
  %v510 = vpack.c.b16 %v426, %v425
  %v511 = vpack.c.b16 %v428, %v427
  %v512 = vpack.c.b16 %v430, %v429
  %v513 = vpack.c.b16 %v432, %v431
  %v514 = vpack.c.b16 %v434, %v433
  %v515 = vpack.c.b16 %v436, %v435
  %v516 = vpack.c.b16 %v438, %v437
  %v517 = vpack.c.b16 %v440, %v439
  %v518 = vpack.c.b16 %v442, %v441
  %v519 = vpack.c.b16 %v444, %v443
  %v520 = vpack.c.b16 %v446, %v445
  %v521 = vpack.c.b16 %v448, %v447
  %v522 = vpack.c.b16 %v450, %v449
  %v527 = vunpack.c.l.b16 %v159
  %v528 = vunpack.c.l.b16 %v160
  %v529 = vunpack.c.l.b16 %v161
  %v530 = vunpack.c.l.b16 %v162
  %v531 = vpack.c.b16 %v528, %v527
  %v532 = vpack.c.b16 %v530, %v529
  %vm535 = vcmask 261120
  %v537 = vsel %vm535, %v451, 0
  %v540 = vsel %vm535, %v452, 0
  %v543 = vsel %vm535, %v453, 0
  %v546 = vsel %vm535, %v454, 0
  %v549 = vsel %vm535, %v455, 0
  %v552 = vsel %vm535, %v456, 0
  %v555 = vsel %vm535, %v457, 0
  %v558 = vsel %vm535, %v458, 0
  %v561 = vsel %vm535, %v459, 0
  %v564 = vsel %vm535, %v460, 0
  %v567 = vsel %vm535, %v461, 0
  %v570 = vsel %vm535, %v462, 0
  %v573 = vsel %vm535, %v463, 0
  %v576 = vsel %vm535, %v464, 0
  %v579 = vsel %vm535, %v465, 0
  %v582 = vsel %vm535, %v466, 0
  %v585 = vsel %vm535, %v467, 0
  %v588 = vsel %vm535, %v468, 0
  %v591 = vsel %vm535, %v469, 0
  %v594 = vsel %vm535, %v470, 0
  %v597 = vsel %vm535, %v471, 0
  %v600 = vsel %vm535, %v472, 0
  %v603 = vsel %vm535, %v473, 0
  %v606 = vsel %vm535, %v474, 0
  %v609 = vsel %vm535, %v475, 0
  %v612 = vsel %vm535, %v476, 0
  %v615 = vsel %vm535, %v477, 0
  %v618 = vsel %vm535, %v478, 0
  %v621 = vsel %vm535, %v479, 0
  %v624 = vsel %vm535, %v480, 0
  %v627 = vsel %vm535, %v481, 0
  %v630 = vsel %vm535, %v482, 0
  %v633 = vsel %vm535, %v483, 0
  %v636 = vsel %vm535, %v484, 0
  %v639 = vsel %vm535, %v485, 0
  %v642 = vsel %vm535, %v486, 0
  %v645 = vsel %vm535, %v487, 0
  %v648 = vsel %vm535, %v488, 0
  %v651 = vsel %vm535, %v489, 0
  %v654 = vsel %vm535, %v490, 0
  %v657 = vsel %vm535, %v491, 0
  %v660 = vsel %vm535, %v492, 0
  %v663 = vsel %vm535, %v493, 0
  %v666 = vsel %vm535, %v494, 0
  %v669 = vsel %vm535, %v495, 0
  %v672 = vsel %vm535, %v496, 0
  %v675 = vsel %vm535, %v497, 0
  %v678 = vsel %vm535, %v498, 0
  %v681 = vsel %vm535, %v499, 0
  %v684 = vsel %vm535, %v500, 0
  %v687 = vsel %vm535, %v501, 0
  %v690 = vsel %vm535, %v502, 0
  %v693 = vsel %vm535, %v503, 0
  %v696 = vsel %vm535, %v504, 0
  %v699 = vsel %vm535, %v505, 0
  %v702 = vsel %vm535, %v506, 0
  %v705 = vsel %vm535, %v507, 0
  %v708 = vsel %vm535, %v508, 0
  %v711 = vsel %vm535, %v509, 0
  %v714 = vsel %vm535, %v510, 0
  %v717 = vsel %vm535, %v511, 0
  %v720 = vsel %vm535, %v512, 0
  %v723 = vsel %vm535, %v513, 0
  %v726 = vsel %vm535, %v514, 0
  %v729 = vsel %vm535, %v515, 0
  %v732 = vsel %vm535, %v516, 0
  %v735 = vsel %vm535, %v517, 0
  %v738 = vsel %vm535, %v518, 0
  %v741 = vsel %vm535, %v519, 0
  %v744 = vsel %vm535, %v520, 0
  %v747 = vsel %vm535, %v521, 0
  %v750 = vsel %vm535, %v522, 0
  %752 = vmatprep.subr.bf16.mxu0 0
  %753 = vmatpush1.bf16.msra.mxu0 %v531
  %754 = vmatprep.subr.bf16.mxu0 0
  %755 = vmatpush1.bf16.msra.mxu0 %v532
  %756 = vmatprep.subr.bf16.mxu0 0
  %757 = vmatpush1.bf16.msra.mxu0 0
  %758 = vmatprep.subr.bf16.mxu0 0
  %759 = vmatpush1.bf16.msra.mxu0 0
  %760 = vmatprep.subr.bf16.mxu0 0
  %761 = vmatpush1.bf16.msra.mxu0 0
  %762 = vmatprep.subr.bf16.mxu0 0
  %763 = vmatpush1.bf16.msra.mxu0 0
  %764 = vmatprep.subr.bf16.mxu0 0
  %765 = vmatpush1.bf16.msra.mxu0 0
  %766 = vmatprep.subr.bf16.mxu0 0
  %767 = vmatpush1.bf16.msra.mxu0 0
  %768 = vmatprep.subr.bf16.mxu0 0
  %769 = vmatpush1.bf16.msra.mxu0 0
  %770 = vmatprep.subr.bf16.mxu0 0
  %771 = vmatpush1.bf16.msra.mxu0 0
  %772 = vmatprep.subr.bf16.mxu0 0
  %773 = vmatpush1.bf16.msra.mxu0 0
  %774 = vmatprep.subr.bf16.mxu0 0
  %775 = vmatpush1.bf16.msra.mxu0 0
  %776 = vmatprep.subr.bf16.mxu0 0
  %777 = vmatpush1.bf16.msra.mxu0 0
  %778 = vmatprep.subr.bf16.mxu0 0
  %779 = vmatpush1.bf16.msra.mxu0 0
  %780 = vmatprep.subr.bf16.mxu0 0
  %781 = vmatpush1.bf16.msra.mxu0 0
  %782 = vmatprep.subr.bf16.mxu0 0
  %783 = vmatpush1.bf16.msra.mxu0 0
  %784 = vmatprep.mubr.bf16.mxu0 0
  %785 = vmatmul.mubr.bf16.gmra.mrb[0].mxu0 %v537
  %v786 = vpop.f32.mrb[0].mxu0
  %v787 = vadd.f32 0.0, %v786
  %v788 = vpop.f32.mrb[0].mxu0
  %v789 = vpop.f32.mrb[0].mxu0
  %v790 = vadd.f32 0.0, %v789
  %v791 = vpop.f32.mrb[0].mxu0
  %792 = vmatprep.mubr.bf16.mxu0 0
  %793 = vmatmul.mubr.bf16.gmra.mrb[0].mxu0 %v540
  %v794 = vpop.f32.mrb[0].mxu0
  %v795 = vadd.f32 0.0, %v794
  %v796 = vpop.f32.mrb[0].mxu0
  %v797 = vpop.f32.mrb[0].mxu0
  %v798 = vadd.f32 0.0, %v797
  %v799 = vpop.f32.mrb[0].mxu0
  %800 = vmatprep.mubr.bf16.mxu0 0
  %801 = vmatmul.mubr.bf16.gmra.mrb[0].mxu0 %v543
  %v802 = vpop.f32.mrb[0].mxu0
  %v803 = vadd.f32 0.0, %v802
  %v804 = vpop.f32.mrb[0].mxu0
  %v805 = vpop.f32.mrb[0].mxu0
  %v806 = vadd.f32 0.0, %v805
  %v807 = vpop.f32.mrb[0].mxu0
  %808 = vmatprep.mubr.bf16.mxu0 0
  %809 = vmatmul.mubr.bf16.gmra.mrb[0].mxu0 %v546
  %v810 = vpop.f32.mrb[0].mxu0
  %v811 = vadd.f32 0.0, %v810
  %v812 = vpop.f32.mrb[0].mxu0
  %v813 = vpop.f32.mrb[0].mxu0
  %v814 = vadd.f32 0.0, %v813
  %v815 = vpop.f32.mrb[0].mxu0
  %816 = vmatprep.mubr.bf16.mxu0 0
  %817 = vmatmul.mubr.bf16.gmra.mrb[0].mxu0 %v549
  %v818 = vpop.f32.mrb[0].mxu0
  %v819 = vadd.f32 0.0, %v818
  %v820 = vpop.f32.mrb[0].mxu0
  %v821 = vpop.f32.mrb[0].mxu0
  %v822 = vadd.f32 0.0, %v821
  %v823 = vpop.f32.mrb[0].mxu0
  %824 = vmatprep.mubr.bf16.mxu0 0
  %825 = vmatmul.mubr.bf16.gmra.mrb[0].mxu0 %v552
  %v826 = vpop.f32.mrb[0].mxu0
  %v827 = vadd.f32 0.0, %v826
  %v828 = vpop.f32.mrb[0].mxu0
  %v829 = vpop.f32.mrb[0].mxu0
  %v830 = vadd.f32 0.0, %v829
  %v831 = vpop.f32.mrb[0].mxu0
  %832 = vmatprep.mubr.bf16.mxu0 0
  %833 = vmatmul.mubr.bf16.gmra.mrb[0].mxu0 %v555
  %v834 = vpop.f32.mrb[0].mxu0
  %v835 = vadd.f32 0.0, %v834
  %v836 = vpop.f32.mrb[0].mxu0
  %v837 = vpop.f32.mrb[0].mxu0
  %v838 = vadd.f32 0.0, %v837
  %v839 = vpop.f32.mrb[0].mxu0
  %840 = vmatprep.mubr.bf16.mxu0 0
  %841 = vmatmul.mubr.bf16.gmra.mrb[0].mxu0 %v558
  %v842 = vpop.f32.mrb[0].mxu0
  %v843 = vadd.f32 0.0, %v842
  %v844 = vpop.f32.mrb[0].mxu0
  %v845 = vpop.f32.mrb[0].mxu0
  %v846 = vadd.f32 0.0, %v845
  %v847 = vpop.f32.mrb[0].mxu0
  %848 = vmatprep.mubr.bf16.mxu0 0
  %849 = vmatmul.mubr.bf16.gmra.mrb[0].mxu0 %v561
  %v850 = vpop.f32.mrb[0].mxu0
  %v851 = vadd.f32 0.0, %v850
  %v852 = vpop.f32.mrb[0].mxu0
  %v853 = vpop.f32.mrb[0].mxu0
  %v854 = vadd.f32 0.0, %v853
  %v855 = vpop.f32.mrb[0].mxu0
  %856 = vmatprep.mubr.bf16.mxu0 0
  %857 = vmatmul.mubr.bf16.gmra.mrb[0].mxu0 %v564
  %v858 = vpop.f32.mrb[0].mxu0
  %v859 = vadd.f32 0.0, %v858
  %v860 = vpop.f32.mrb[0].mxu0
  %v861 = vpop.f32.mrb[0].mxu0
  %v862 = vadd.f32 0.0, %v861
  %v863 = vpop.f32.mrb[0].mxu0
  %864 = vmatprep.mubr.bf16.mxu0 0
  %865 = vmatmul.mubr.bf16.gmra.mrb[0].mxu0 %v567
  %v866 = vpop.f32.mrb[0].mxu0
  %v867 = vadd.f32 0.0, %v866
  %v868 = vpop.f32.mrb[0].mxu0
  %v869 = vpop.f32.mrb[0].mxu0
  %v870 = vadd.f32 0.0, %v869
  %v871 = vpop.f32.mrb[0].mxu0
  %872 = vmatprep.mubr.bf16.mxu0 0
  %873 = vmatmul.mubr.bf16.gmra.mrb[0].mxu0 %v570
  %v874 = vpop.f32.mrb[0].mxu0
  %v875 = vadd.f32 0.0, %v874
  %v876 = vpop.f32.mrb[0].mxu0
  %v877 = vpop.f32.mrb[0].mxu0
  %v878 = vadd.f32 0.0, %v877
  %v879 = vpop.f32.mrb[0].mxu0
  %880 = vmatprep.mubr.bf16.mxu0 0
  %881 = vmatmul.mubr.bf16.gmra.mrb[0].mxu0 %v573
  %v882 = vpop.f32.mrb[0].mxu0
  %v883 = vadd.f32 0.0, %v882
  %v884 = vpop.f32.mrb[0].mxu0
  %v885 = vpop.f32.mrb[0].mxu0
  %v886 = vadd.f32 0.0, %v885
  %v887 = vpop.f32.mrb[0].mxu0
  %888 = vmatprep.mubr.bf16.mxu0 0
  %889 = vmatmul.mubr.bf16.gmra.mrb[0].mxu0 %v576
  %v890 = vpop.f32.mrb[0].mxu0
  %v891 = vadd.f32 0.0, %v890
  %v892 = vpop.f32.mrb[0].mxu0
  %v893 = vpop.f32.mrb[0].mxu0
  %v894 = vadd.f32 0.0, %v893
  %v895 = vpop.f32.mrb[0].mxu0
  %896 = vmatprep.mubr.bf16.mxu0 0
  %897 = vmatmul.mubr.bf16.gmra.mrb[0].mxu0 %v579
  %v898 = vpop.f32.mrb[0].mxu0
  %v899 = vadd.f32 0.0, %v898
  %v900 = vpop.f32.mrb[0].mxu0
  %v901 = vpop.f32.mrb[0].mxu0
  %v902 = vadd.f32 0.0, %v901
  %v903 = vpop.f32.mrb[0].mxu0
  %904 = vmatprep.mubr.bf16.mxu0 0
  %905 = vmatmul.mubr.bf16.gmra.mrb[0].mxu0 %v582
  %v906 = vpop.f32.mrb[0].mxu0
  %v907 = vadd.f32 0.0, %v906
  %v908 = vpop.f32.mrb[0].mxu0
  %v909 = vpop.f32.mrb[0].mxu0
  %v910 = vadd.f32 0.0, %v909
  %v911 = vpop.f32.mrb[0].mxu0
  %912 = vmatprep.mubr.bf16.mxu0 0
  %913 = vmatmul.mubr.bf16.gmra.mrb[0].mxu0 %v585
  %v914 = vpop.f32.mrb[0].mxu0
  %v915 = vadd.f32 0.0, %v914
  %v916 = vpop.f32.mrb[0].mxu0
  %v917 = vpop.f32.mrb[0].mxu0
  %v918 = vadd.f32 0.0, %v917
  %v919 = vpop.f32.mrb[0].mxu0
  %920 = vmatprep.mubr.bf16.mxu0 0
  %921 = vmatmul.mubr.bf16.gmra.mrb[0].mxu0 %v588
  %v922 = vpop.f32.mrb[0].mxu0
  %v923 = vadd.f32 0.0, %v922
  %v924 = vpop.f32.mrb[0].mxu0
  %v925 = vpop.f32.mrb[0].mxu0
  %v926 = vadd.f32 0.0, %v925
  %v927 = vpop.f32.mrb[0].mxu0
  %928 = vmatprep.mubr.bf16.mxu0 0
  %929 = vmatmul.mubr.bf16.gmra.mrb[0].mxu0 %v591
  %v930 = vpop.f32.mrb[0].mxu0
  %v931 = vadd.f32 0.0, %v930
  %v932 = vpop.f32.mrb[0].mxu0
  %v933 = vpop.f32.mrb[0].mxu0
  %v934 = vadd.f32 0.0, %v933
  %v935 = vpop.f32.mrb[0].mxu0
  %936 = vmatprep.mubr.bf16.mxu0 0
  %937 = vmatmul.mubr.bf16.gmra.mrb[0].mxu0 %v594
  %v938 = vpop.f32.mrb[0].mxu0
  %v939 = vadd.f32 0.0, %v938
  %v940 = vpop.f32.mrb[0].mxu0
  %v941 = vpop.f32.mrb[0].mxu0
  %v942 = vadd.f32 0.0, %v941
  %v943 = vpop.f32.mrb[0].mxu0
  %944 = vmatprep.mubr.bf16.mxu0 0
  %945 = vmatmul.mubr.bf16.gmra.mrb[0].mxu0 %v597
  %v946 = vpop.f32.mrb[0].mxu0
  %v947 = vadd.f32 0.0, %v946
  %v948 = vpop.f32.mrb[0].mxu0
  %v949 = vpop.f32.mrb[0].mxu0
  %v950 = vadd.f32 0.0, %v949
  %v951 = vpop.f32.mrb[0].mxu0
  %952 = vmatprep.mubr.bf16.mxu0 0
  %953 = vmatmul.mubr.bf16.gmra.mrb[0].mxu0 %v600
  %v954 = vpop.f32.mrb[0].mxu0
  %v955 = vadd.f32 0.0, %v954
  %v956 = vpop.f32.mrb[0].mxu0
  %v957 = vpop.f32.mrb[0].mxu0
  %v958 = vadd.f32 0.0, %v957
  %v959 = vpop.f32.mrb[0].mxu0
  %960 = vmatprep.mubr.bf16.mxu0 0
  %961 = vmatmul.mubr.bf16.gmra.mrb[0].mxu0 %v603
  %v962 = vpop.f32.mrb[0].mxu0
  %v963 = vadd.f32 0.0, %v962
  %v964 = vpop.f32.mrb[0].mxu0
  %v965 = vpop.f32.mrb[0].mxu0
  %v966 = vadd.f32 0.0, %v965
  %v967 = vpop.f32.mrb[0].mxu0
  %968 = vmatprep.mubr.bf16.mxu0 0
  %969 = vmatmul.mubr.bf16.gmra.mrb[0].mxu0 %v606
  %v970 = vpop.f32.mrb[0].mxu0
  %v971 = vadd.f32 0.0, %v970
  %v972 = vpop.f32.mrb[0].mxu0
  %v973 = vpop.f32.mrb[0].mxu0
  %v974 = vadd.f32 0.0, %v973
  %v975 = vpop.f32.mrb[0].mxu0
  %976 = vmatprep.mubr.bf16.mxu0 0
  %977 = vmatmul.mubr.bf16.gmra.mrb[0].mxu0 %v609
  %v978 = vpop.f32.mrb[0].mxu0
  %v979 = vadd.f32 0.0, %v978
  %v980 = vpop.f32.mrb[0].mxu0
  %v981 = vpop.f32.mrb[0].mxu0
  %v982 = vadd.f32 0.0, %v981
  %v983 = vpop.f32.mrb[0].mxu0
  %984 = vmatprep.mubr.bf16.mxu0 0
  %985 = vmatmul.mubr.bf16.gmra.mrb[0].mxu0 %v612
  %v986 = vpop.f32.mrb[0].mxu0
  %v987 = vadd.f32 0.0, %v986
  %v988 = vpop.f32.mrb[0].mxu0
  %v989 = vpop.f32.mrb[0].mxu0
  %v990 = vadd.f32 0.0, %v989
  %v991 = vpop.f32.mrb[0].mxu0
  %992 = vmatprep.mubr.bf16.mxu0 0
  %993 = vmatmul.mubr.bf16.gmra.mrb[0].mxu0 %v615
  %v994 = vpop.f32.mrb[0].mxu0
  %v995 = vadd.f32 0.0, %v994
  %v996 = vpop.f32.mrb[0].mxu0
  %v997 = vpop.f32.mrb[0].mxu0
  %v998 = vadd.f32 0.0, %v997
  %v999 = vpop.f32.mrb[0].mxu0
  %1000 = vmatprep.mubr.bf16.mxu0 0
  %1001 = vmatmul.mubr.bf16.gmra.mrb[0].mxu0 %v618
  %v1002 = vpop.f32.mrb[0].mxu0
  %v1003 = vadd.f32 0.0, %v1002
  %v1004 = vpop.f32.mrb[0].mxu0
  %v1005 = vpop.f32.mrb[0].mxu0
  %v1006 = vadd.f32 0.0, %v1005
  %v1007 = vpop.f32.mrb[0].mxu0
  %1008 = vmatprep.mubr.bf16.mxu0 0
  %1009 = vmatmul.mubr.bf16.gmra.mrb[0].mxu0 %v621
  %v1010 = vpop.f32.mrb[0].mxu0
  %v1011 = vadd.f32 0.0, %v1010
  %v1012 = vpop.f32.mrb[0].mxu0
  %v1013 = vpop.f32.mrb[0].mxu0
  %v1014 = vadd.f32 0.0, %v1013
  %v1015 = vpop.f32.mrb[0].mxu0
  %1016 = vmatprep.mubr.bf16.mxu0 0
  %1017 = vmatmul.mubr.bf16.gmra.mrb[0].mxu0 %v624
  %v1018 = vpop.f32.mrb[0].mxu0
  %v1019 = vadd.f32 0.0, %v1018
  %v1020 = vpop.f32.mrb[0].mxu0
  %v1021 = vpop.f32.mrb[0].mxu0
  %v1022 = vadd.f32 0.0, %v1021
  %v1023 = vpop.f32.mrb[0].mxu0
  %1024 = vmatprep.mubr.bf16.mxu0 0
  %1025 = vmatmul.mubr.bf16.gmra.mrb[0].mxu0 %v627
  %v1026 = vpop.f32.mrb[0].mxu0
  %v1027 = vadd.f32 0.0, %v1026
  %v1028 = vpop.f32.mrb[0].mxu0
  %v1029 = vpop.f32.mrb[0].mxu0
  %v1030 = vadd.f32 0.0, %v1029
  %v1031 = vpop.f32.mrb[0].mxu0
  %1032 = vmatprep.mubr.bf16.mxu0 0
  %1033 = vmatmul.mubr.bf16.gmra.mrb[0].mxu0 %v630
  %v1034 = vpop.f32.mrb[0].mxu0
  %v1035 = vadd.f32 0.0, %v1034
  %v1036 = vpop.f32.mrb[0].mxu0
  %v1037 = vpop.f32.mrb[0].mxu0
  %v1038 = vadd.f32 0.0, %v1037
  %v1039 = vpop.f32.mrb[0].mxu0
  %1040 = vmatprep.mubr.bf16.mxu0 0
  %1041 = vmatmul.mubr.bf16.gmra.mrb[0].mxu0 %v633
  %v1042 = vpop.f32.mrb[0].mxu0
  %v1043 = vadd.f32 0.0, %v1042
  %v1044 = vpop.f32.mrb[0].mxu0
  %v1045 = vpop.f32.mrb[0].mxu0
  %v1046 = vadd.f32 0.0, %v1045
  %v1047 = vpop.f32.mrb[0].mxu0
  %1048 = vmatprep.mubr.bf16.mxu0 0
  %1049 = vmatmul.mubr.bf16.gmra.mrb[0].mxu0 %v636
  %v1050 = vpop.f32.mrb[0].mxu0
  %v1051 = vadd.f32 0.0, %v1050
  %v1052 = vpop.f32.mrb[0].mxu0
  %v1053 = vpop.f32.mrb[0].mxu0
  %v1054 = vadd.f32 0.0, %v1053
  %v1055 = vpop.f32.mrb[0].mxu0
  %1056 = vmatprep.mubr.bf16.mxu0 0
  %1057 = vmatmul.mubr.bf16.gmra.mrb[0].mxu0 %v639
  %v1058 = vpop.f32.mrb[0].mxu0
  %v1059 = vadd.f32 0.0, %v1058
  %v1060 = vpop.f32.mrb[0].mxu0
  %v1061 = vpop.f32.mrb[0].mxu0
  %v1062 = vadd.f32 0.0, %v1061
  %v1063 = vpop.f32.mrb[0].mxu0
  %1064 = vmatprep.mubr.bf16.mxu0 0
  %1065 = vmatmul.mubr.bf16.gmra.mrb[0].mxu0 %v642
  %v1066 = vpop.f32.mrb[0].mxu0
  %v1067 = vadd.f32 0.0, %v1066
  %v1068 = vpop.f32.mrb[0].mxu0
  %v1069 = vpop.f32.mrb[0].mxu0
  %v1070 = vadd.f32 0.0, %v1069
  %v1071 = vpop.f32.mrb[0].mxu0
  %1072 = vmatprep.mubr.bf16.mxu0 0
  %1073 = vmatmul.mubr.bf16.gmra.mrb[0].mxu0 %v645
  %v1074 = vpop.f32.mrb[0].mxu0
  %v1075 = vadd.f32 0.0, %v1074
  %v1076 = vpop.f32.mrb[0].mxu0
  %v1077 = vpop.f32.mrb[0].mxu0
  %v1078 = vadd.f32 0.0, %v1077
  %v1079 = vpop.f32.mrb[0].mxu0
  %1080 = vmatprep.mubr.bf16.mxu0 0
  %1081 = vmatmul.mubr.bf16.gmra.mrb[0].mxu0 %v648
  %v1082 = vpop.f32.mrb[0].mxu0
  %v1083 = vadd.f32 0.0, %v1082
  %v1084 = vpop.f32.mrb[0].mxu0
  %v1085 = vpop.f32.mrb[0].mxu0
  %v1086 = vadd.f32 0.0, %v1085
  %v1087 = vpop.f32.mrb[0].mxu0
  %1088 = vmatprep.mubr.bf16.mxu0 0
  %1089 = vmatmul.mubr.bf16.gmra.mrb[0].mxu0 %v651
  %v1090 = vpop.f32.mrb[0].mxu0
  %v1091 = vadd.f32 0.0, %v1090
  %v1092 = vpop.f32.mrb[0].mxu0
  %v1093 = vpop.f32.mrb[0].mxu0
  %v1094 = vadd.f32 0.0, %v1093
  %v1095 = vpop.f32.mrb[0].mxu0
  %1096 = vmatprep.mubr.bf16.mxu0 0
  %1097 = vmatmul.mubr.bf16.gmra.mrb[0].mxu0 %v654
  %v1098 = vpop.f32.mrb[0].mxu0
  %v1099 = vadd.f32 0.0, %v1098
  %v1100 = vpop.f32.mrb[0].mxu0
  %v1101 = vpop.f32.mrb[0].mxu0
  %v1102 = vadd.f32 0.0, %v1101
  %v1103 = vpop.f32.mrb[0].mxu0
  %1104 = vmatprep.mubr.bf16.mxu0 0
  %1105 = vmatmul.mubr.bf16.gmra.mrb[0].mxu0 %v657
  %v1106 = vpop.f32.mrb[0].mxu0
  %v1107 = vadd.f32 0.0, %v1106
  %v1108 = vpop.f32.mrb[0].mxu0
  %v1109 = vpop.f32.mrb[0].mxu0
  %v1110 = vadd.f32 0.0, %v1109
  %v1111 = vpop.f32.mrb[0].mxu0
  %1112 = vmatprep.mubr.bf16.mxu0 0
  %1113 = vmatmul.mubr.bf16.gmra.mrb[0].mxu0 %v660
  %v1114 = vpop.f32.mrb[0].mxu0
  %v1115 = vadd.f32 0.0, %v1114
  %v1116 = vpop.f32.mrb[0].mxu0
  %v1117 = vpop.f32.mrb[0].mxu0
  %v1118 = vadd.f32 0.0, %v1117
  %v1119 = vpop.f32.mrb[0].mxu0
  %1120 = vmatprep.mubr.bf16.mxu0 0
  %1121 = vmatmul.mubr.bf16.gmra.mrb[0].mxu0 %v663
  %v1122 = vpop.f32.mrb[0].mxu0
  %v1123 = vadd.f32 0.0, %v1122
  %v1124 = vpop.f32.mrb[0].mxu0
  %v1125 = vpop.f32.mrb[0].mxu0
  %v1126 = vadd.f32 0.0, %v1125
  %v1127 = vpop.f32.mrb[0].mxu0
  %1128 = vmatprep.mubr.bf16.mxu0 0
  %1129 = vmatmul.mubr.bf16.gmra.mrb[0].mxu0 %v666
  %v1130 = vpop.f32.mrb[0].mxu0
  %v1131 = vadd.f32 0.0, %v1130
  %v1132 = vpop.f32.mrb[0].mxu0
  %v1133 = vpop.f32.mrb[0].mxu0
  %v1134 = vadd.f32 0.0, %v1133
  %v1135 = vpop.f32.mrb[0].mxu0
  %1136 = vmatprep.mubr.bf16.mxu0 0
  %1137 = vmatmul.mubr.bf16.gmra.mrb[0].mxu0 %v669
  %v1138 = vpop.f32.mrb[0].mxu0
  %v1139 = vadd.f32 0.0, %v1138
  %v1140 = vpop.f32.mrb[0].mxu0
  %v1141 = vpop.f32.mrb[0].mxu0
  %v1142 = vadd.f32 0.0, %v1141
  %v1143 = vpop.f32.mrb[0].mxu0
  %1144 = vmatprep.mubr.bf16.mxu0 0
  %1145 = vmatmul.mubr.bf16.gmra.mrb[0].mxu0 %v672
  %v1146 = vpop.f32.mrb[0].mxu0
  %v1147 = vadd.f32 0.0, %v1146
  %v1148 = vpop.f32.mrb[0].mxu0
  %v1149 = vpop.f32.mrb[0].mxu0
  %v1150 = vadd.f32 0.0, %v1149
  %v1151 = vpop.f32.mrb[0].mxu0
  %1152 = vmatprep.mubr.bf16.mxu0 0
  %1153 = vmatmul.mubr.bf16.gmra.mrb[0].mxu0 %v675
  %v1154 = vpop.f32.mrb[0].mxu0
  %v1155 = vadd.f32 0.0, %v1154
  %v1156 = vpop.f32.mrb[0].mxu0
  %v1157 = vpop.f32.mrb[0].mxu0
  %v1158 = vadd.f32 0.0, %v1157
  %v1159 = vpop.f32.mrb[0].mxu0
  %1160 = vmatprep.mubr.bf16.mxu0 0
  %1161 = vmatmul.mubr.bf16.gmra.mrb[0].mxu0 %v678
  %v1162 = vpop.f32.mrb[0].mxu0
  %v1163 = vadd.f32 0.0, %v1162
  %v1164 = vpop.f32.mrb[0].mxu0
  %v1165 = vpop.f32.mrb[0].mxu0
  %v1166 = vadd.f32 0.0, %v1165
  %v1167 = vpop.f32.mrb[0].mxu0
  %1168 = vmatprep.mubr.bf16.mxu0 0
  %1169 = vmatmul.mubr.bf16.gmra.mrb[0].mxu0 %v681
  %v1170 = vpop.f32.mrb[0].mxu0
  %v1171 = vadd.f32 0.0, %v1170
  %v1172 = vpop.f32.mrb[0].mxu0
  %v1173 = vpop.f32.mrb[0].mxu0
  %v1174 = vadd.f32 0.0, %v1173
  %v1175 = vpop.f32.mrb[0].mxu0
  %1176 = vmatprep.mubr.bf16.mxu0 0
  %1177 = vmatmul.mubr.bf16.gmra.mrb[0].mxu0 %v684
  %v1178 = vpop.f32.mrb[0].mxu0
  %v1179 = vadd.f32 0.0, %v1178
  %v1180 = vpop.f32.mrb[0].mxu0
  %v1181 = vpop.f32.mrb[0].mxu0
  %v1182 = vadd.f32 0.0, %v1181
  %v1183 = vpop.f32.mrb[0].mxu0
  %1184 = vmatprep.mubr.bf16.mxu0 0
  %1185 = vmatmul.mubr.bf16.gmra.mrb[0].mxu0 %v687
  %v1186 = vpop.f32.mrb[0].mxu0
  %v1187 = vadd.f32 0.0, %v1186
  %v1188 = vpop.f32.mrb[0].mxu0
  %v1189 = vpop.f32.mrb[0].mxu0
  %v1190 = vadd.f32 0.0, %v1189
  %v1191 = vpop.f32.mrb[0].mxu0
  %1192 = vmatprep.mubr.bf16.mxu0 0
  %1193 = vmatmul.mubr.bf16.gmra.mrb[0].mxu0 %v690
  %v1194 = vpop.f32.mrb[0].mxu0
  %v1195 = vadd.f32 0.0, %v1194
  %v1196 = vpop.f32.mrb[0].mxu0
  %v1197 = vpop.f32.mrb[0].mxu0
  %v1198 = vadd.f32 0.0, %v1197
  %v1199 = vpop.f32.mrb[0].mxu0
  %1200 = vmatprep.mubr.bf16.mxu0 0
  %1201 = vmatmul.mubr.bf16.gmra.mrb[0].mxu0 %v693
  %v1202 = vpop.f32.mrb[0].mxu0
  %v1203 = vadd.f32 0.0, %v1202
  %v1204 = vpop.f32.mrb[0].mxu0
  %v1205 = vpop.f32.mrb[0].mxu0
  %v1206 = vadd.f32 0.0, %v1205
  %v1207 = vpop.f32.mrb[0].mxu0
  %1208 = vmatprep.mubr.bf16.mxu0 0
  %1209 = vmatmul.mubr.bf16.gmra.mrb[0].mxu0 %v696
  %v1210 = vpop.f32.mrb[0].mxu0
  %v1211 = vadd.f32 0.0, %v1210
  %v1212 = vpop.f32.mrb[0].mxu0
  %v1213 = vpop.f32.mrb[0].mxu0
  %v1214 = vadd.f32 0.0, %v1213
  %v1215 = vpop.f32.mrb[0].mxu0
  %1216 = vmatprep.mubr.bf16.mxu0 0
  %1217 = vmatmul.mubr.bf16.gmra.mrb[0].mxu0 %v699
  %v1218 = vpop.f32.mrb[0].mxu0
  %v1219 = vadd.f32 0.0, %v1218
  %v1220 = vpop.f32.mrb[0].mxu0
  %v1221 = vpop.f32.mrb[0].mxu0
  %v1222 = vadd.f32 0.0, %v1221
  %v1223 = vpop.f32.mrb[0].mxu0
  %1224 = vmatprep.mubr.bf16.mxu0 0
  %1225 = vmatmul.mubr.bf16.gmra.mrb[0].mxu0 %v702
  %v1226 = vpop.f32.mrb[0].mxu0
  %v1227 = vadd.f32 0.0, %v1226
  %v1228 = vpop.f32.mrb[0].mxu0
  %v1229 = vpop.f32.mrb[0].mxu0
  %v1230 = vadd.f32 0.0, %v1229
  %v1231 = vpop.f32.mrb[0].mxu0
  %1232 = vmatprep.mubr.bf16.mxu0 0
  %1233 = vmatmul.mubr.bf16.gmra.mrb[0].mxu0 %v705
  %v1234 = vpop.f32.mrb[0].mxu0
  %v1235 = vadd.f32 0.0, %v1234
  %v1236 = vpop.f32.mrb[0].mxu0
  %v1237 = vpop.f32.mrb[0].mxu0
  %v1238 = vadd.f32 0.0, %v1237
  %v1239 = vpop.f32.mrb[0].mxu0
  %1240 = vmatprep.mubr.bf16.mxu0 0
  %1241 = vmatmul.mubr.bf16.gmra.mrb[0].mxu0 %v708
  %v1242 = vpop.f32.mrb[0].mxu0
  %v1243 = vadd.f32 0.0, %v1242
  %v1244 = vpop.f32.mrb[0].mxu0
  %v1245 = vpop.f32.mrb[0].mxu0
  %v1246 = vadd.f32 0.0, %v1245
  %v1247 = vpop.f32.mrb[0].mxu0
  %1248 = vmatprep.mubr.bf16.mxu0 0
  %1249 = vmatmul.mubr.bf16.gmra.mrb[0].mxu0 %v711
  %v1250 = vpop.f32.mrb[0].mxu0
  %v1251 = vadd.f32 0.0, %v1250
  %v1252 = vpop.f32.mrb[0].mxu0
  %v1253 = vpop.f32.mrb[0].mxu0
  %v1254 = vadd.f32 0.0, %v1253
  %v1255 = vpop.f32.mrb[0].mxu0
  %1256 = vmatprep.mubr.bf16.mxu0 0
  %1257 = vmatmul.mubr.bf16.gmra.mrb[0].mxu0 %v714
  %v1258 = vpop.f32.mrb[0].mxu0
  %v1259 = vadd.f32 0.0, %v1258
  %v1260 = vpop.f32.mrb[0].mxu0
  %v1261 = vpop.f32.mrb[0].mxu0
  %v1262 = vadd.f32 0.0, %v1261
  %v1263 = vpop.f32.mrb[0].mxu0
  %1264 = vmatprep.mubr.bf16.mxu0 0
  %1265 = vmatmul.mubr.bf16.gmra.mrb[0].mxu0 %v717
  %v1266 = vpop.f32.mrb[0].mxu0
  %v1267 = vadd.f32 0.0, %v1266
  %v1268 = vpop.f32.mrb[0].mxu0
  %v1269 = vpop.f32.mrb[0].mxu0
  %v1270 = vadd.f32 0.0, %v1269
  %v1271 = vpop.f32.mrb[0].mxu0
  %1272 = vmatprep.mubr.bf16.mxu0 0
  %1273 = vmatmul.mubr.bf16.gmra.mrb[0].mxu0 %v720
  %v1274 = vpop.f32.mrb[0].mxu0
  %v1275 = vadd.f32 0.0, %v1274
  %v1276 = vpop.f32.mrb[0].mxu0
  %v1277 = vpop.f32.mrb[0].mxu0
  %v1278 = vadd.f32 0.0, %v1277
  %v1279 = vpop.f32.mrb[0].mxu0
  %1280 = vmatprep.mubr.bf16.mxu0 0
  %1281 = vmatmul.mubr.bf16.gmra.mrb[0].mxu0 %v723
  %v1282 = vpop.f32.mrb[0].mxu0
  %v1283 = vadd.f32 0.0, %v1282
  %v1284 = vpop.f32.mrb[0].mxu0
  %v1285 = vpop.f32.mrb[0].mxu0
  %v1286 = vadd.f32 0.0, %v1285
  %v1287 = vpop.f32.mrb[0].mxu0
  %1288 = vmatprep.mubr.bf16.mxu0 0
  %1289 = vmatmul.mubr.bf16.gmra.mrb[0].mxu0 %v726
  %v1290 = vpop.f32.mrb[0].mxu0
  %v1291 = vadd.f32 0.0, %v1290
  %v1292 = vpop.f32.mrb[0].mxu0
  %v1293 = vpop.f32.mrb[0].mxu0
  %v1294 = vadd.f32 0.0, %v1293
  %v1295 = vpop.f32.mrb[0].mxu0
  %1296 = vmatprep.mubr.bf16.mxu0 0
  %1297 = vmatmul.mubr.bf16.gmra.mrb[0].mxu0 %v729
  %v1298 = vpop.f32.mrb[0].mxu0
  %v1299 = vadd.f32 0.0, %v1298
  %v1300 = vpop.f32.mrb[0].mxu0
  %v1301 = vpop.f32.mrb[0].mxu0
  %v1302 = vadd.f32 0.0, %v1301
  %v1303 = vpop.f32.mrb[0].mxu0
  %1304 = vmatprep.mubr.bf16.mxu0 0
  %1305 = vmatmul.mubr.bf16.gmra.mrb[0].mxu0 %v732
  %v1306 = vpop.f32.mrb[0].mxu0
  %v1307 = vadd.f32 0.0, %v1306
  %v1308 = vpop.f32.mrb[0].mxu0
  %v1309 = vpop.f32.mrb[0].mxu0
  %v1310 = vadd.f32 0.0, %v1309
  %v1311 = vpop.f32.mrb[0].mxu0
  %1312 = vmatprep.mubr.bf16.mxu0 0
  %1313 = vmatmul.mubr.bf16.gmra.mrb[0].mxu0 %v735
  %v1314 = vpop.f32.mrb[0].mxu0
  %v1315 = vadd.f32 0.0, %v1314
  %v1316 = vpop.f32.mrb[0].mxu0
  %v1317 = vpop.f32.mrb[0].mxu0
  %v1318 = vadd.f32 0.0, %v1317
  %v1319 = vpop.f32.mrb[0].mxu0
  %1320 = vmatprep.mubr.bf16.mxu0 0
  %1321 = vmatmul.mubr.bf16.gmra.mrb[0].mxu0 %v738
  %v1322 = vpop.f32.mrb[0].mxu0
  %v1323 = vadd.f32 0.0, %v1322
  %v1324 = vpop.f32.mrb[0].mxu0
  %v1325 = vpop.f32.mrb[0].mxu0
  %v1326 = vadd.f32 0.0, %v1325
  %v1327 = vpop.f32.mrb[0].mxu0
  %1328 = vmatprep.mubr.bf16.mxu0 0
  %1329 = vmatmul.mubr.bf16.gmra.mrb[0].mxu0 %v741
  %v1330 = vpop.f32.mrb[0].mxu0
  %v1331 = vadd.f32 0.0, %v1330
  %v1332 = vpop.f32.mrb[0].mxu0
  %v1333 = vpop.f32.mrb[0].mxu0
  %v1334 = vadd.f32 0.0, %v1333
  %v1335 = vpop.f32.mrb[0].mxu0
  %1336 = vmatprep.mubr.bf16.mxu0 0
  %1337 = vmatmul.mubr.bf16.gmra.mrb[0].mxu0 %v744
  %v1338 = vpop.f32.mrb[0].mxu0
  %v1339 = vadd.f32 0.0, %v1338
  %v1340 = vpop.f32.mrb[0].mxu0
  %v1341 = vpop.f32.mrb[0].mxu0
  %v1342 = vadd.f32 0.0, %v1341
  %v1343 = vpop.f32.mrb[0].mxu0
  %1344 = vmatprep.mubr.bf16.mxu0 0
  %1345 = vmatmul.mubr.bf16.gmra.mrb[0].mxu0 %v747
  %v1346 = vpop.f32.mrb[0].mxu0
  %v1347 = vadd.f32 0.0, %v1346
  %v1348 = vpop.f32.mrb[0].mxu0
  %v1349 = vpop.f32.mrb[0].mxu0
  %v1350 = vadd.f32 0.0, %v1349
  %v1351 = vpop.f32.mrb[0].mxu0
  %1352 = vmatprep.mubr.bf16.mxu0 0
  %1353 = vmatmul.mubr.bf16.gmra.mrb[0].mxu0 %v750
  %v1354 = vpop.f32.mrb[0].mxu0
  %v1355 = vadd.f32 0.0, %v1354
  %v1356 = vpop.f32.mrb[0].mxu0
  %v1357 = vpop.f32.mrb[0].mxu0
  %v1358 = vadd.f32 0.0, %v1357
  %v1359 = vpop.f32.mrb[0].mxu0
  %1360 = vdwg.mxu0
  %v1361 = vmax.f32 %v787, %v931
  %v1362 = vmax.f32 %v1361, %v1075
  %v1363 = vmax.f32 %v1362, %v1219
  %v1364 = vmax.f32 %v790, %v934
  %v1365 = vmax.f32 %v1364, %v1078
  %v1366 = vmax.f32 %v1365, %v1222
  %v1367 = vmax.f32 %v795, %v939
  %v1368 = vmax.f32 %v1367, %v1083
  %v1369 = vmax.f32 %v1368, %v1227
  %v1370 = vmax.f32 %v798, %v942
  %v1371 = vmax.f32 %v1370, %v1086
  %v1372 = vmax.f32 %v1371, %v1230
  %v1373 = vmax.f32 %v803, %v947
  %v1374 = vmax.f32 %v1373, %v1091
  %v1375 = vmax.f32 %v1374, %v1235
  %v1376 = vmax.f32 %v806, %v950
  %v1377 = vmax.f32 %v1376, %v1094
  %v1378 = vmax.f32 %v1377, %v1238
  %v1379 = vmax.f32 %v811, %v955
  %v1380 = vmax.f32 %v1379, %v1099
  %v1381 = vmax.f32 %v1380, %v1243
  %v1382 = vmax.f32 %v814, %v958
  %v1383 = vmax.f32 %v1382, %v1102
  %v1384 = vmax.f32 %v1383, %v1246
  %v1385 = vmax.f32 %v819, %v963
  %v1386 = vmax.f32 %v1385, %v1107
  %v1387 = vmax.f32 %v1386, %v1251
  %v1388 = vmax.f32 %v822, %v966
  %v1389 = vmax.f32 %v1388, %v1110
  %v1390 = vmax.f32 %v1389, %v1254
  %v1391 = vmax.f32 %v827, %v971
  %v1392 = vmax.f32 %v1391, %v1115
  %v1393 = vmax.f32 %v1392, %v1259
  %v1394 = vmax.f32 %v830, %v974
  %v1395 = vmax.f32 %v1394, %v1118
  %v1396 = vmax.f32 %v1395, %v1262
  %v1397 = vmax.f32 %v835, %v979
  %v1398 = vmax.f32 %v1397, %v1123
  %v1399 = vmax.f32 %v1398, %v1267
  %v1400 = vmax.f32 %v838, %v982
  %v1401 = vmax.f32 %v1400, %v1126
  %v1402 = vmax.f32 %v1401, %v1270
  %v1403 = vmax.f32 %v843, %v987
  %v1404 = vmax.f32 %v1403, %v1131
  %v1405 = vmax.f32 %v1404, %v1275
  %v1406 = vmax.f32 %v846, %v990
  %v1407 = vmax.f32 %v1406, %v1134
  %v1408 = vmax.f32 %v1407, %v1278
  %v1409 = vmax.f32 %v851, %v995
  %v1410 = vmax.f32 %v1409, %v1139
  %v1411 = vmax.f32 %v1410, %v1283
  %v1412 = vmax.f32 %v854, %v998
  %v1413 = vmax.f32 %v1412, %v1142
  %v1414 = vmax.f32 %v1413, %v1286
  %v1415 = vmax.f32 %v859, %v1003
  %v1416 = vmax.f32 %v1415, %v1147
  %v1417 = vmax.f32 %v1416, %v1291
  %v1418 = vmax.f32 %v862, %v1006
  %v1419 = vmax.f32 %v1418, %v1150
  %v1420 = vmax.f32 %v1419, %v1294
  %v1421 = vmax.f32 %v867, %v1011
  %v1422 = vmax.f32 %v1421, %v1155
  %v1423 = vmax.f32 %v1422, %v1299
  %v1424 = vmax.f32 %v870, %v1014
  %v1425 = vmax.f32 %v1424, %v1158
  %v1426 = vmax.f32 %v1425, %v1302
  %v1427 = vmax.f32 %v875, %v1019
  %v1428 = vmax.f32 %v1427, %v1163
  %v1429 = vmax.f32 %v1428, %v1307
  %v1430 = vmax.f32 %v878, %v1022
  %v1431 = vmax.f32 %v1430, %v1166
  %v1432 = vmax.f32 %v1431, %v1310
  %v1433 = vmax.f32 %v883, %v1027
  %v1434 = vmax.f32 %v1433, %v1171
  %v1435 = vmax.f32 %v1434, %v1315
  %v1436 = vmax.f32 %v886, %v1030
  %v1437 = vmax.f32 %v1436, %v1174
  %v1438 = vmax.f32 %v1437, %v1318
  %v1439 = vmax.f32 %v891, %v1035
  %v1440 = vmax.f32 %v1439, %v1179
  %v1441 = vmax.f32 %v1440, %v1323
  %v1442 = vmax.f32 %v894, %v1038
  %v1443 = vmax.f32 %v1442, %v1182
  %v1444 = vmax.f32 %v1443, %v1326
  %v1445 = vmax.f32 %v899, %v1043
  %v1446 = vmax.f32 %v1445, %v1187
  %v1447 = vmax.f32 %v1446, %v1331
  %v1448 = vmax.f32 %v902, %v1046
  %v1449 = vmax.f32 %v1448, %v1190
  %v1450 = vmax.f32 %v1449, %v1334
  %v1451 = vmax.f32 %v907, %v1051
  %v1452 = vmax.f32 %v1451, %v1195
  %v1453 = vmax.f32 %v1452, %v1339
  %v1454 = vmax.f32 %v910, %v1054
  %v1455 = vmax.f32 %v1454, %v1198
  %v1456 = vmax.f32 %v1455, %v1342
  %v1457 = vmax.f32 %v915, %v1059
  %v1458 = vmax.f32 %v1457, %v1203
  %v1459 = vmax.f32 %v1458, %v1347
  %v1460 = vmax.f32 %v918, %v1062
  %v1461 = vmax.f32 %v1460, %v1206
  %v1462 = vmax.f32 %v1461, %v1350
  %v1463 = vmax.f32 %v923, %v1067
  %v1464 = vmax.f32 %v1463, %v1211
  %v1465 = vmax.f32 %v1464, %v1355
  %v1466 = vmax.f32 %v926, %v1070
  %v1467 = vmax.f32 %v1466, %v1214
  %v1468 = vmax.f32 %v1467, %v1358
  %v1469 = vld [vmem:[%s2] sm:$0x1]
  %v1471 = vlaneseq
  %v1472 = vshrl.u32 %v1471, 7
  %v1473 = vsub.s32 0, %v1472
  %v1474 = vrot.slane %v1469, %v1473
  %v1476 = vadd.f32 %v1363, %v1474
  %v1477 = vadd.f32 %v1366, %v1474
  %v1478 = vadd.f32 %v1369, %v1474
  %v1479 = vadd.f32 %v1372, %v1474
  %v1480 = vadd.f32 %v1375, %v1474
  %v1481 = vadd.f32 %v1378, %v1474
  %v1482 = vadd.f32 %v1381, %v1474
  %v1483 = vadd.f32 %v1384, %v1474
  %v1484 = vadd.f32 %v1387, %v1474
  %v1485 = vadd.f32 %v1390, %v1474
  %v1486 = vadd.f32 %v1393, %v1474
  %v1487 = vadd.f32 %v1396, %v1474
  %v1488 = vadd.f32 %v1399, %v1474
  %v1489 = vadd.f32 %v1402, %v1474
  %v1490 = vadd.f32 %v1405, %v1474
  %v1491 = vadd.f32 %v1408, %v1474
  %v1492 = vadd.f32 %v1411, %v1474
  %v1493 = vadd.f32 %v1414, %v1474
  %v1494 = vadd.f32 %v1417, %v1474
  %v1495 = vadd.f32 %v1420, %v1474
  %v1496 = vadd.f32 %v1423, %v1474
  %v1497 = vadd.f32 %v1426, %v1474
  %v1498 = vadd.f32 %v1429, %v1474
  %v1499 = vadd.f32 %v1432, %v1474
  %v1500 = vadd.f32 %v1435, %v1474
  %v1501 = vadd.f32 %v1438, %v1474
  %v1502 = vadd.f32 %v1441, %v1474
  %v1503 = vadd.f32 %v1444, %v1474
  %v1504 = vadd.f32 %v1447, %v1474
  %v1505 = vadd.f32 %v1450, %v1474
  %v1506 = vadd.f32 %v1453, %v1474
  %v1507 = vadd.f32 %v1456, %v1474
  %v1508 = vadd.f32 %v1459, %v1474
  %v1509 = vadd.f32 %v1462, %v1474
  %v1510 = vadd.f32 %v1465, %v1474
  %v1511 = vadd.f32 %v1468, %v1474
  %v1512 = vmax.f32 %v1476, 0.0
  %v1513 = vmax.f32 %v1477, 0.0
  %v1514 = vmax.f32 %v1478, 0.0
  %v1515 = vmax.f32 %v1479, 0.0
  %v1516 = vmax.f32 %v1480, 0.0
  %v1517 = vmax.f32 %v1481, 0.0
  %v1518 = vmax.f32 %v1482, 0.0
  %v1519 = vmax.f32 %v1483, 0.0
  %v1520 = vmax.f32 %v1484, 0.0
  %v1521 = vmax.f32 %v1485, 0.0
  %v1522 = vmax.f32 %v1486, 0.0
  %v1523 = vmax.f32 %v1487, 0.0
  %v1524 = vmax.f32 %v1488, 0.0
  %v1525 = vmax.f32 %v1489, 0.0
  %v1526 = vmax.f32 %v1490, 0.0
  %v1527 = vmax.f32 %v1491, 0.0
  %v1528 = vmax.f32 %v1492, 0.0
  %v1529 = vmax.f32 %v1493, 0.0
  %v1530 = vmax.f32 %v1494, 0.0
  %v1531 = vmax.f32 %v1495, 0.0
  %v1532 = vmax.f32 %v1496, 0.0
  %v1533 = vmax.f32 %v1497, 0.0
  %v1534 = vmax.f32 %v1498, 0.0
  %v1535 = vmax.f32 %v1499, 0.0
  %v1536 = vmax.f32 %v1500, 0.0
  %v1537 = vmax.f32 %v1501, 0.0
  %v1538 = vmax.f32 %v1502, 0.0
  %v1539 = vmax.f32 %v1503, 0.0
  %v1540 = vmax.f32 %v1504, 0.0
  %v1541 = vmax.f32 %v1505, 0.0
  %v1542 = vmax.f32 %v1506, 0.0
  %v1543 = vmax.f32 %v1507, 0.0
  %v1544 = vmax.f32 %v1508, 0.0
  %v1545 = vmax.f32 %v1509, 0.0
  %v1546 = vmax.f32 %v1510, 0.0
  %v1547 = vmax.f32 %v1511, 0.0
  %1548 = vst [vmem:[%s3] sm:$0xff] %v1512
  %1549 = vst [vmem:[%s3 + $0x8] sm:$0xff] %v1513
  %1550 = vst [vmem:[%s3 + $0x10] sm:$0xff] %v1514
  %1551 = vst [vmem:[%s3 + $0x18] sm:$0xff] %v1515
  %1552 = vst [vmem:[%s3 + $0x20] sm:$0xff] %v1516
  %1553 = vst [vmem:[%s3 + $0x28] sm:$0xff] %v1517
  %1554 = vst [vmem:[%s3 + $0x30] sm:$0xff] %v1518
  %1555 = vst [vmem:[%s3 + $0x38] sm:$0xff] %v1519
  %1556 = vst [vmem:[%s3 + $0x40] sm:$0xff] %v1520
  %1557 = vst [vmem:[%s3 + $0x48] sm:$0xff] %v1521
  %1558 = vst [vmem:[%s3 + $0x50] sm:$0xff] %v1522
  %1559 = vst [vmem:[%s3 + $0x58] sm:$0xff] %v1523
  %1560 = vst [vmem:[%s3 + $0x60] sm:$0xff] %v1524
  %1561 = vst [vmem:[%s3 + $0x68] sm:$0xff] %v1525
  %1562 = vst [vmem:[%s3 + $0x70] sm:$0xff] %v1526
  %1563 = vst [vmem:[%s3 + $0x78] sm:$0xff] %v1527
  %1564 = vst [vmem:[%s3 + $0x80] sm:$0xff] %v1528
  %1565 = vst [vmem:[%s3 + $0x88] sm:$0xff] %v1529
  %1566 = vst [vmem:[%s3 + $0x90] sm:$0xff] %v1530
  %1567 = vst [vmem:[%s3 + $0x98] sm:$0xff] %v1531
  %1568 = vst [vmem:[%s3 + $0xa0] sm:$0xff] %v1532
  %1569 = vst [vmem:[%s3 + $0xa8] sm:$0xff] %v1533
  %1570 = vst [vmem:[%s3 + $0xb0] sm:$0xff] %v1534
  %1571 = vst [vmem:[%s3 + $0xb8] sm:$0xff] %v1535
  %1572 = vst [vmem:[%s3 + $0xc0] sm:$0xff] %v1536
  %1573 = vst [vmem:[%s3 + $0xc8] sm:$0xff] %v1537
  %1574 = vst [vmem:[%s3 + $0xd0] sm:$0xff] %v1538
  %1575 = vst [vmem:[%s3 + $0xd8] sm:$0xff] %v1539
  %1576 = vst [vmem:[%s3 + $0xe0] sm:$0xff] %v1540
  %1577 = vst [vmem:[%s3 + $0xe8] sm:$0xff] %v1541
  %1578 = vst [vmem:[%s3 + $0xf0] sm:$0xff] %v1542
  %1579 = vst [vmem:[%s3 + $0xf8] sm:$0xff] %v1543
  %1580 = vst [vmem:[%s3 + $0x100] sm:$0xff] %v1544
  %1581 = vst [vmem:[%s3 + $0x108] sm:$0xff] %v1545
  %1582 = vst [vmem:[%s3 + $0x110] sm:$0xff] %v1546
  %1583 = vst [vmem:[%s3 + $0x118] sm:$0xff] %v1547
  // Predicated region
  $region14: #{mnist_net_forward.3} parent=0 // pred_check
    _
  $region15: #{mnist_net_forward.3} parent=0 // pred_check_branch
    %1585 = sbr.rel (0) target = $region17
  $region16: #{mnist_net_forward.3} parent=0 // pred_region
    _
  $region17: #{mnist_net_forward.3} parent=0 // pred_fallthru
    _
  // Predicated region
  $region18: #{mnist_net_forward.3} parent=0 // pred_check
    _
  $region19: #{mnist_net_forward.3} parent=0 // pred_check_branch
    %1587 = sbr.rel (0) target = $region21
  $region20: #{mnist_net_forward.3} parent=0 // pred_region
    _
  $region21: #{mnist_net_forward.3} parent=0 // pred_fallthru
    _

// kernel: mnist_net_forward.4
$region0: #{mnist_net_forward.4}
  #allocation0 [shape = 'u32[]', space=smem, size = 0x4, offset = 0x4, fixed_abs, tag = 'smem constant byte address 0x4 - core index']
  #allocation1 [shape = 'u32[144,128]{1,0:T(1,128)}', space=vmem, size = 0x12000, scoped, tag = 'internal scratch']
  %s0 = inlined_call_operand.vmem [shape: bf16[4,32,256], index: 0, kind: input, shape index: {}]
  %s1 = inlined_call_operand.vmem [shape: bf16[256,128], index: 1, kind: input, shape index: {}]
  %s2 = inlined_call_operand.vmem [shape: f32[1,128], index: 2, kind: input, shape index: {}]
  %s3 = inlined_call_operand.vmem [shape: f32[32,128], index: 3, kind: output, shape index: {}]
  %s4 = sld [smem:[#allocation0]]
  $region22: #{mnist_net_forward.4} parent=0
    _
  %s6 = ssub.s32 1, %s4
  %s7 = scalar_select 0, %s6, %s4
  // Predicated region
  $region2: #{mnist_net_forward.4} parent=0 // pred_check
    _
  $region3: #{mnist_net_forward.4} parent=0 // pred_check_branch
    %9 = sbr.rel (0) target = $region5
  $region4: #{mnist_net_forward.4} parent=0 // pred_region
    _
  $region5: #{mnist_net_forward.4} parent=0 // pred_fallthru
    _
  // Predicated region
  $region6: #{mnist_net_forward.4} parent=0 // pred_check
    _
  $region7: #{mnist_net_forward.4} parent=0 // pred_check_branch
    %11 = sbr.rel (0) target = $region9
  $region8: #{mnist_net_forward.4} parent=0 // pred_region
    _
  $region9: #{mnist_net_forward.4} parent=0 // pred_fallthru
    _
  // Predicated region
  $region10: #{mnist_net_forward.4} parent=0 // pred_check
    _
  $region11: #{mnist_net_forward.4} parent=0 // pred_check_branch
    %13 = sbr.rel (0) target = $region13
  $region12: #{mnist_net_forward.4} parent=0 // pred_region
    _
  $region13: #{mnist_net_forward.4} parent=0 // pred_fallthru
    _
  %v15 = vld [vmem:[%s0] sm:$0xff]
  %v16 = vld [vmem:[%s0 + $0x8] sm:$0xff]
  %v17 = vld [vmem:[%s0 + $0x10] sm:$0xff]
  %v18 = vld [vmem:[%s0 + $0x18] sm:$0xff]
  %v19 = vld [vmem:[%s0 + $0x20] sm:$0xff]
  %v20 = vld [vmem:[%s0 + $0x28] sm:$0xff]
  %v21 = vld [vmem:[%s0 + $0x30] sm:$0xff]
  %v22 = vld [vmem:[%s0 + $0x38] sm:$0xff]
  %v23 = vld [vmem:[%s0 + $0x40] sm:$0xff]
  %v24 = vld [vmem:[%s0 + $0x48] sm:$0xff]
  %v25 = vld [vmem:[%s0 + $0x50] sm:$0xff]
  %v26 = vld [vmem:[%s0 + $0x58] sm:$0xff]
  %v27 = vld [vmem:[%s0 + $0x60] sm:$0xff]
  %v28 = vld [vmem:[%s0 + $0x68] sm:$0xff]
  %v29 = vld [vmem:[%s0 + $0x70] sm:$0xff]
  %v30 = vld [vmem:[%s0 + $0x78] sm:$0xff]
  %v31 = vld [vmem:[%s1] sm:$0xf]
  %v32 = vld [vmem:[%s1 + $0x4] sm:$0xf]
  %v33 = vld [vmem:[%s1 + $0x8] sm:$0xf]
  %v34 = vld [vmem:[%s1 + $0xc] sm:$0xf]
  %v35 = vld [vmem:[%s1 + $0x10] sm:$0xf]
  %v36 = vld [vmem:[%s1 + $0x14] sm:$0xf]
  %v37 = vld [vmem:[%s1 + $0x18] sm:$0xf]
  %v38 = vld [vmem:[%s1 + $0x1c] sm:$0xf]
  %v39 = vld [vmem:[%s1 + $0x20] sm:$0xf]
  %v40 = vld [vmem:[%s1 + $0x24] sm:$0xf]
  %v41 = vld [vmem:[%s1 + $0x28] sm:$0xf]
  %v42 = vld [vmem:[%s1 + $0x2c] sm:$0xf]
  %v43 = vld [vmem:[%s1 + $0x30] sm:$0xf]
  %v44 = vld [vmem:[%s1 + $0x34] sm:$0xf]
  %v45 = vld [vmem:[%s1 + $0x38] sm:$0xf]
  %v46 = vld [vmem:[%s1 + $0x3c] sm:$0xf]
  %v47 = vld [vmem:[%s1 + $0x40] sm:$0xf]
  %v48 = vld [vmem:[%s1 + $0x44] sm:$0xf]
  %v49 = vld [vmem:[%s1 + $0x48] sm:$0xf]
  %v50 = vld [vmem:[%s1 + $0x4c] sm:$0xf]
  %v51 = vld [vmem:[%s1 + $0x50] sm:$0xf]
  %v52 = vld [vmem:[%s1 + $0x54] sm:$0xf]
  %v53 = vld [vmem:[%s1 + $0x58] sm:$0xf]
  %v54 = vld [vmem:[%s1 + $0x5c] sm:$0xf]
  %v55 = vld [vmem:[%s1 + $0x60] sm:$0xf]
  %v56 = vld [vmem:[%s1 + $0x64] sm:$0xf]
  %v57 = vld [vmem:[%s1 + $0x68] sm:$0xf]
  %v58 = vld [vmem:[%s1 + $0x6c] sm:$0xf]
  %v59 = vld [vmem:[%s1 + $0x70] sm:$0xf]
  %v60 = vld [vmem:[%s1 + $0x74] sm:$0xf]
  %v61 = vld [vmem:[%s1 + $0x78] sm:$0xf]
  %v62 = vld [vmem:[%s1 + $0x7c] sm:$0xf]
  %v79 = vunpack.c.l.b16 %v15
  %v80 = vunpack.c.h.b16 %v15
  %v81 = vunpack.c.l.b16 %v16
  %v82 = vunpack.c.h.b16 %v16
  %v83 = vunpack.c.l.b16 %v17
  %v84 = vunpack.c.h.b16 %v17
  %v85 = vunpack.c.l.b16 %v18
  %v86 = vunpack.c.h.b16 %v18
  %v87 = vunpack.c.l.b16 %v19
  %v88 = vunpack.c.h.b16 %v19
  %v89 = vunpack.c.l.b16 %v20
  %v90 = vunpack.c.h.b16 %v20
  %v91 = vunpack.c.l.b16 %v21
  %v92 = vunpack.c.h.b16 %v21
  %v93 = vunpack.c.l.b16 %v22
  %v94 = vunpack.c.h.b16 %v22
  %v95 = vunpack.c.l.b16 %v23
  %v96 = vunpack.c.h.b16 %v23
  %v97 = vunpack.c.l.b16 %v24
  %v98 = vunpack.c.h.b16 %v24
  %v99 = vunpack.c.l.b16 %v25
  %v100 = vunpack.c.h.b16 %v25
  %v101 = vunpack.c.l.b16 %v26
  %v102 = vunpack.c.h.b16 %v26
  %v103 = vunpack.c.l.b16 %v27
  %v104 = vunpack.c.h.b16 %v27
  %v105 = vunpack.c.l.b16 %v28
  %v106 = vunpack.c.h.b16 %v28
  %v107 = vunpack.c.l.b16 %v29
  %v108 = vunpack.c.h.b16 %v29
  %v109 = vunpack.c.l.b16 %v30
  %v110 = vunpack.c.h.b16 %v30
  %v111 = vpack.c.b16 %v81, %v79
  %v112 = vpack.c.b16 %v82, %v80
  %v113 = vpack.c.b16 %v85, %v83
  %v114 = vpack.c.b16 %v86, %v84
  %v115 = vpack.c.b16 %v89, %v87
  %v116 = vpack.c.b16 %v90, %v88
  %v117 = vpack.c.b16 %v93, %v91
  %v118 = vpack.c.b16 %v94, %v92
  %v119 = vpack.c.b16 %v97, %v95
  %v120 = vpack.c.b16 %v98, %v96
  %v121 = vpack.c.b16 %v101, %v99
  %v122 = vpack.c.b16 %v102, %v100
  %v123 = vpack.c.b16 %v105, %v103
  %v124 = vpack.c.b16 %v106, %v104
  %v125 = vpack.c.b16 %v109, %v107
  %v126 = vpack.c.b16 %v110, %v108
  %v175 = vunpack.c.l.b16 %v31
  %v176 = vunpack.c.l.b16 %v32
  %v177 = vunpack.c.l.b16 %v33
  %v178 = vunpack.c.l.b16 %v34
  %v179 = vunpack.c.l.b16 %v35
  %v180 = vunpack.c.l.b16 %v36
  %v181 = vunpack.c.l.b16 %v37
  %v182 = vunpack.c.l.b16 %v38
  %v183 = vunpack.c.l.b16 %v39
  %v184 = vunpack.c.l.b16 %v40
  %v185 = vunpack.c.l.b16 %v41
  %v186 = vunpack.c.l.b16 %v42
  %v187 = vunpack.c.l.b16 %v43
  %v188 = vunpack.c.l.b16 %v44
  %v189 = vunpack.c.l.b16 %v45
  %v190 = vunpack.c.l.b16 %v46
  %v191 = vunpack.c.l.b16 %v47
  %v192 = vunpack.c.l.b16 %v48
  %v193 = vunpack.c.l.b16 %v49
  %v194 = vunpack.c.l.b16 %v50
  %v195 = vunpack.c.l.b16 %v51
  %v196 = vunpack.c.l.b16 %v52
  %v197 = vunpack.c.l.b16 %v53
  %v198 = vunpack.c.l.b16 %v54
  %v199 = vunpack.c.l.b16 %v55
  %v200 = vunpack.c.l.b16 %v56
  %v201 = vunpack.c.l.b16 %v57
  %v202 = vunpack.c.l.b16 %v58
  %v203 = vunpack.c.l.b16 %v59
  %v204 = vunpack.c.l.b16 %v60
  %v205 = vunpack.c.l.b16 %v61
  %v206 = vunpack.c.l.b16 %v62
  %v207 = vpack.c.b16 %v176, %v175
  %v208 = vpack.c.b16 %v178, %v177
  %v209 = vpack.c.b16 %v180, %v179
  %v210 = vpack.c.b16 %v182, %v181
  %v211 = vpack.c.b16 %v184, %v183
  %v212 = vpack.c.b16 %v186, %v185
  %v213 = vpack.c.b16 %v188, %v187
  %v214 = vpack.c.b16 %v190, %v189
  %v215 = vpack.c.b16 %v192, %v191
  %v216 = vpack.c.b16 %v194, %v193
  %v217 = vpack.c.b16 %v196, %v195
  %v218 = vpack.c.b16 %v198, %v197
  %v219 = vpack.c.b16 %v200, %v199
  %v220 = vpack.c.b16 %v202, %v201
  %v221 = vpack.c.b16 %v204, %v203
  %v222 = vpack.c.b16 %v206, %v205
  %239 = vmatprep.subr.bf16.mxu0 0
  %240 = vmatpush1.bf16.msra.mxu0 %v207
  %241 = vmatprep.subr.bf16.mxu0 0
  %242 = vmatpush1.bf16.msra.mxu0 %v208
  %243 = vmatprep.subr.bf16.mxu0 0
  %244 = vmatpush1.bf16.msra.mxu0 %v209
  %245 = vmatprep.subr.bf16.mxu0 0
  %246 = vmatpush1.bf16.msra.mxu0 %v210
  %247 = vmatprep.subr.bf16.mxu0 0
  %248 = vmatpush1.bf16.msra.mxu0 %v211
  %249 = vmatprep.subr.bf16.mxu0 0
  %250 = vmatpush1.bf16.msra.mxu0 %v212
  %251 = vmatprep.subr.bf16.mxu0 0
  %252 = vmatpush1.bf16.msra.mxu0 %v213
  %253 = vmatprep.subr.bf16.mxu0 0
  %254 = vmatpush1.bf16.msra.mxu0 %v214
  %255 = vmatprep.subr.bf16.mxu0 0
  %256 = vmatpush1.bf16.msra.mxu0 %v215
  %257 = vmatprep.subr.bf16.mxu0 0
  %258 = vmatpush1.bf16.msra.mxu0 %v216
  %259 = vmatprep.subr.bf16.mxu0 0
  %260 = vmatpush1.bf16.msra.mxu0 %v217
  %261 = vmatprep.subr.bf16.mxu0 0
  %262 = vmatpush1.bf16.msra.mxu0 %v218
  %263 = vmatprep.subr.bf16.mxu0 0
  %264 = vmatpush1.bf16.msra.mxu0 %v219
  %265 = vmatprep.subr.bf16.mxu0 0
  %266 = vmatpush1.bf16.msra.mxu0 %v220
  %267 = vmatprep.subr.bf16.mxu0 0
  %268 = vmatpush1.bf16.msra.mxu0 %v221
  %269 = vmatprep.subr.bf16.mxu0 0
  %270 = vmatpush1.bf16.msra.mxu0 %v222
  %271 = vmatprep.mubr.bf16.mxu0 %v112
  %272 = vmatmul.mubr.bf16.gmra.mrb[0].mxu0 %v111
  %v273 = vpop.f32.mrb[0].mxu0
  %v274 = vadd.f32 0.0, %v273
  %v275 = vpop.f32.mrb[0].mxu0
  %v276 = vpop.f32.mrb[0].mxu0
  %v277 = vadd.f32 0.0, %v276
  %v278 = vpop.f32.mrb[0].mxu0
  %279 = vmatprep.mubr.bf16.mxu0 %v114
  %280 = vmatmul.mubr.bf16.gmra.mrb[0].mxu0 %v113
  %v281 = vpop.f32.mrb[0].mxu0
  %v282 = vadd.f32 0.0, %v281
  %v283 = vpop.f32.mrb[0].mxu0
  %v284 = vpop.f32.mrb[0].mxu0
  %v285 = vadd.f32 0.0, %v284
  %v286 = vpop.f32.mrb[0].mxu0
  %287 = vmatprep.mubr.bf16.mxu0 %v116
  %288 = vmatmul.mubr.bf16.gmra.mrb[0].mxu0 %v115
  %v289 = vpop.f32.mrb[0].mxu0
  %v290 = vadd.f32 0.0, %v289
  %v291 = vpop.f32.mrb[0].mxu0
  %v292 = vpop.f32.mrb[0].mxu0
  %v293 = vadd.f32 0.0, %v292
  %v294 = vpop.f32.mrb[0].mxu0
  %295 = vmatprep.mubr.bf16.mxu0 %v118
  %296 = vmatmul.mubr.bf16.gmra.mrb[0].mxu0 %v117
  %v297 = vpop.f32.mrb[0].mxu0
  %v298 = vadd.f32 0.0, %v297
  %v299 = vpop.f32.mrb[0].mxu0
  %v300 = vpop.f32.mrb[0].mxu0
  %v301 = vadd.f32 0.0, %v300
  %v302 = vpop.f32.mrb[0].mxu0
  %303 = vmatprep.mubr.bf16.mxu0 %v120
  %304 = vmatmul.mubr.bf16.gmra.mrb[0].mxu0 %v119
  %v305 = vpop.f32.mrb[0].mxu0
  %v306 = vadd.f32 0.0, %v305
  %v307 = vpop.f32.mrb[0].mxu0
  %v308 = vpop.f32.mrb[0].mxu0
  %v309 = vadd.f32 0.0, %v308
  %v310 = vpop.f32.mrb[0].mxu0
  %311 = vmatprep.mubr.bf16.mxu0 %v122
  %312 = vmatmul.mubr.bf16.gmra.mrb[0].mxu0 %v121
  %v313 = vpop.f32.mrb[0].mxu0
  %v314 = vadd.f32 0.0, %v313
  %v315 = vpop.f32.mrb[0].mxu0
  %v316 = vpop.f32.mrb[0].mxu0
  %v317 = vadd.f32 0.0, %v316
  %v318 = vpop.f32.mrb[0].mxu0
  %319 = vmatprep.mubr.bf16.mxu0 %v124
  %320 = vmatmul.mubr.bf16.gmra.mrb[0].mxu0 %v123
  %v321 = vpop.f32.mrb[0].mxu0
  %v322 = vadd.f32 0.0, %v321
  %v323 = vpop.f32.mrb[0].mxu0
  %v324 = vpop.f32.mrb[0].mxu0
  %v325 = vadd.f32 0.0, %v324
  %v326 = vpop.f32.mrb[0].mxu0
  %327 = vmatprep.mubr.bf16.mxu0 %v126
  %328 = vmatmul.mubr.bf16.gmra.mrb[0].mxu0 %v125
  %v329 = vpop.f32.mrb[0].mxu0
  %v330 = vadd.f32 0.0, %v329
  %v331 = vpop.f32.mrb[0].mxu0
  %v332 = vpop.f32.mrb[0].mxu0
  %v333 = vadd.f32 0.0, %v332
  %v334 = vpop.f32.mrb[0].mxu0
  %335 = vdwg.mxu0
  %v336 = vmax.f32 %v274, %v290
  %v337 = vmax.f32 %v336, %v306
  %v338 = vmax.f32 %v337, %v322
  %v339 = vmax.f32 %v277, %v293
  %v340 = vmax.f32 %v339, %v309
  %v341 = vmax.f32 %v340, %v325
  %v342 = vmax.f32 %v282, %v298
  %v343 = vmax.f32 %v342, %v314
  %v344 = vmax.f32 %v343, %v330
  %v345 = vmax.f32 %v285, %v301
  %v346 = vmax.f32 %v345, %v317
  %v347 = vmax.f32 %v346, %v333
  %v348 = vld [vmem:[%s2] sm:$0x1]
  %v350 = vlaneseq
  %v351 = vshrl.u32 %v350, 7
  %v352 = vsub.s32 0, %v351
  %v353 = vrot.slane %v348, %v352
  %v355 = vadd.f32 %v338, %v353
  %v356 = vadd.f32 %v341, %v353
  %v357 = vadd.f32 %v344, %v353
  %v358 = vadd.f32 %v347, %v353
  %v359 = vmax.f32 %v355, 0.0
  %v360 = vmax.f32 %v356, 0.0
  %v361 = vmax.f32 %v357, 0.0
  %v362 = vmax.f32 %v358, 0.0
  %363 = vst [vmem:[%s3] sm:$0xff] %v359
  %364 = vst [vmem:[%s3 + $0x8] sm:$0xff] %v360
  %365 = vst [vmem:[%s3 + $0x10] sm:$0xff] %v361
  %366 = vst [vmem:[%s3 + $0x18] sm:$0xff] %v362
  // Predicated region
  $region14: #{mnist_net_forward.4} parent=0 // pred_check
    _
  $region15: #{mnist_net_forward.4} parent=0 // pred_check_branch
    %368 = sbr.rel (0) target = $region17
  $region16: #{mnist_net_forward.4} parent=0 // pred_region
    _
  $region17: #{mnist_net_forward.4} parent=0 // pred_fallthru
    _
  // Predicated region
  $region18: #{mnist_net_forward.4} parent=0 // pred_check
    _
  $region19: #{mnist_net_forward.4} parent=0 // pred_check_branch
    %370 = sbr.rel (0) target = $region21
  $region20: #{mnist_net_forward.4} parent=0 // pred_region
    _
  $region21: #{mnist_net_forward.4} parent=0 // pred_fallthru
    _

// kernel: mnist_net_forward.5
$region0: #{mnist_net_forward.5}
  #allocation0 [shape = 'u32[]', space=smem, size = 0x4, offset = 0x4, fixed_abs, tag = 'smem constant byte address 0x4 - core index']
  #allocation1 [shape = 'u32[144,128]{1,0:T(1,128)}', space=vmem, size = 0x12000, scoped, tag = 'internal scratch']
  %s0 = inlined_call_operand.vmem [shape: bf16[16,320], index: 0, kind: input, shape index: {}]
  %s1 = inlined_call_operand.vmem [shape: bf16[320,128], index: 1, kind: input, shape index: {}]
  %s2 = inlined_call_operand.vmem [shape: f32[1,128], index: 2, kind: input, shape index: {}]
  %s3 = inlined_call_operand.vmem [shape: bf16[128,128], index: 3, kind: input, shape index: {}]
  %s4 = inlined_call_operand.vmem [shape: f32[1,128], index: 4, kind: input, shape index: {}]
  %s5 = inlined_call_operand.vmem [shape: f32[16,128], index: 5, kind: output, shape index: {}]
  %s6 = sld [smem:[#allocation0]]
  $region30: #{mnist_net_forward.5} parent=0
    _
  %s8 = ssub.s32 1, %s6
  %s9 = scalar_select 0, %s8, %s6
  // Predicated region
  $region2: #{mnist_net_forward.5} parent=0 // pred_check
    _
  $region3: #{mnist_net_forward.5} parent=0 // pred_check_branch
    %11 = sbr.rel (0) target = $region5
  $region4: #{mnist_net_forward.5} parent=0 // pred_region
    _
  $region5: #{mnist_net_forward.5} parent=0 // pred_fallthru
    _
  // Predicated region
  $region6: #{mnist_net_forward.5} parent=0 // pred_check
    _
  $region7: #{mnist_net_forward.5} parent=0 // pred_check_branch
    %13 = sbr.rel (0) target = $region9
  $region8: #{mnist_net_forward.5} parent=0 // pred_region
    _
  $region9: #{mnist_net_forward.5} parent=0 // pred_fallthru
    _
  // Predicated region
  $region10: #{mnist_net_forward.5} parent=0 // pred_check
    _
  $region11: #{mnist_net_forward.5} parent=0 // pred_check_branch
    %15 = sbr.rel (0) target = $region13
  $region12: #{mnist_net_forward.5} parent=0 // pred_region
    _
  $region13: #{mnist_net_forward.5} parent=0 // pred_fallthru
    _
  // Predicated region
  $region14: #{mnist_net_forward.5} parent=0 // pred_check
    _
  $region15: #{mnist_net_forward.5} parent=0 // pred_check_branch
    %17 = sbr.rel (0) target = $region17
  $region16: #{mnist_net_forward.5} parent=0 // pred_region
    _
  $region17: #{mnist_net_forward.5} parent=0 // pred_fallthru
    _
  // Predicated region
  $region18: #{mnist_net_forward.5} parent=0 // pred_check
    _
  $region19: #{mnist_net_forward.5} parent=0 // pred_check_branch
    %19 = sbr.rel (0) target = $region21
  $region20: #{mnist_net_forward.5} parent=0 // pred_region
    _
  $region21: #{mnist_net_forward.5} parent=0 // pred_fallthru
    _
  %v21 = vld [vmem:[%s0] sm:$0xff]
  %v22 = vld [vmem:[%s0 + $0x8] sm:$0xf]
  %v23 = vld [vmem:[%s0 + $0xc] sm:$0xff]
  %v24 = vld [vmem:[%s0 + $0x14] sm:$0xf]
  %v25 = vld [vmem:[%s1] sm:$0xf]
  %v26 = vld [vmem:[%s1 + $0x4] sm:$0xf]
  %v27 = vld [vmem:[%s1 + $0x8] sm:$0xf]
  %v28 = vld [vmem:[%s1 + $0xc] sm:$0xf]
  %v29 = vld [vmem:[%s1 + $0x10] sm:$0xf]
  %v30 = vld [vmem:[%s1 + $0x14] sm:$0xf]
  %v31 = vld [vmem:[%s1 + $0x18] sm:$0xf]
  %v32 = vld [vmem:[%s1 + $0x1c] sm:$0xf]
  %v33 = vld [vmem:[%s1 + $0x20] sm:$0xf]
  %v34 = vld [vmem:[%s1 + $0x24] sm:$0xf]
  %v35 = vld [vmem:[%s1 + $0x28] sm:$0xf]
  %v36 = vld [vmem:[%s1 + $0x2c] sm:$0xf]
  %v37 = vld [vmem:[%s1 + $0x30] sm:$0xf]
  %v38 = vld [vmem:[%s1 + $0x34] sm:$0xf]
  %v39 = vld [vmem:[%s1 + $0x38] sm:$0xf]
  %v40 = vld [vmem:[%s1 + $0x3c] sm:$0xf]
  %v41 = vld [vmem:[%s1 + $0x40] sm:$0xf]
  %v42 = vld [vmem:[%s1 + $0x44] sm:$0xf]
  %v43 = vld [vmem:[%s1 + $0x48] sm:$0xf]
  %v44 = vld [vmem:[%s1 + $0x4c] sm:$0xf]
  %v45 = vld [vmem:[%s1 + $0x50] sm:$0xf]
  %v46 = vld [vmem:[%s1 + $0x54] sm:$0xf]
  %v47 = vld [vmem:[%s1 + $0x58] sm:$0xf]
  %v48 = vld [vmem:[%s1 + $0x5c] sm:$0xf]
  %v49 = vld [vmem:[%s1 + $0x60] sm:$0xf]
  %v50 = vld [vmem:[%s1 + $0x64] sm:$0xf]
  %v51 = vld [vmem:[%s1 + $0x68] sm:$0xf]
  %v52 = vld [vmem:[%s1 + $0x6c] sm:$0xf]
  %v53 = vld [vmem:[%s1 + $0x70] sm:$0xf]
  %v54 = vld [vmem:[%s1 + $0x74] sm:$0xf]
  %v55 = vld [vmem:[%s1 + $0x78] sm:$0xf]
  %v56 = vld [vmem:[%s1 + $0x7c] sm:$0xf]
  %v57 = vld [vmem:[%s1 + $0x80] sm:$0xf]
  %v58 = vld [vmem:[%s1 + $0x84] sm:$0xf]
  %v59 = vld [vmem:[%s1 + $0x88] sm:$0xf]
  %v60 = vld [vmem:[%s1 + $0x8c] sm:$0xf]
  %v61 = vld [vmem:[%s1 + $0x90] sm:$0xf]
  %v62 = vld [vmem:[%s1 + $0x94] sm:$0xf]
  %v63 = vld [vmem:[%s1 + $0x98] sm:$0xf]
  %v64 = vld [vmem:[%s1 + $0x9c] sm:$0xf]
  %v65 = vld [vmem:[%s2] sm:$0x1]
  %v67 = vlaneseq
  %v68 = vshrl.u32 %v67, 7
  %v69 = vsub.s32 0, %v68
  %v70 = vrot.slane %v65, %v69
  %v76 = vunpack.c.l.b16 %v21
  %v77 = vunpack.c.h.b16 %v21
  %v78 = vunpack.c.l.b16 %v22
  %v79 = vunpack.c.l.b16 %v23
  %v80 = vunpack.c.h.b16 %v23
  %v81 = vunpack.c.l.b16 %v24
  %v82 = vpack.c.b16 %v79, %v76
  %v83 = vpack.c.b16 %v80, %v77
  %v84 = vpack.c.b16 %v81, %v78
  %v127 = vunpack.c.l.b16 %v25
  %v128 = vunpack.c.l.b16 %v26
  %v129 = vunpack.c.l.b16 %v27
  %v130 = vunpack.c.l.b16 %v28
  %v131 = vunpack.c.l.b16 %v29
  %v132 = vunpack.c.l.b16 %v30
  %v133 = vunpack.c.l.b16 %v31
  %v134 = vunpack.c.l.b16 %v32
  %v135 = vunpack.c.l.b16 %v33
  %v136 = vunpack.c.l.b16 %v34
  %v137 = vunpack.c.l.b16 %v35
  %v138 = vunpack.c.l.b16 %v36
  %v139 = vunpack.c.l.b16 %v37
  %v140 = vunpack.c.l.b16 %v38
  %v141 = vunpack.c.l.b16 %v39
  %v142 = vunpack.c.l.b16 %v40
  %v143 = vunpack.c.l.b16 %v41
  %v144 = vunpack.c.l.b16 %v42
  %v145 = vunpack.c.l.b16 %v43
  %v146 = vunpack.c.l.b16 %v44
  %v147 = vunpack.c.l.b16 %v45
  %v148 = vunpack.c.l.b16 %v46
  %v149 = vunpack.c.l.b16 %v47
  %v150 = vunpack.c.l.b16 %v48
  %v151 = vunpack.c.l.b16 %v49
  %v152 = vunpack.c.l.b16 %v50
  %v153 = vunpack.c.l.b16 %v51
  %v154 = vunpack.c.l.b16 %v52
  %v155 = vunpack.c.l.b16 %v53
  %v156 = vunpack.c.l.b16 %v54
  %v157 = vunpack.c.l.b16 %v55
  %v158 = vunpack.c.l.b16 %v56
  %v159 = vunpack.c.l.b16 %v57
  %v160 = vunpack.c.l.b16 %v58
  %v161 = vunpack.c.l.b16 %v59
  %v162 = vunpack.c.l.b16 %v60
  %v163 = vunpack.c.l.b16 %v61
  %v164 = vunpack.c.l.b16 %v62
  %v165 = vunpack.c.l.b16 %v63
  %v166 = vunpack.c.l.b16 %v64
  %v167 = vpack.c.b16 %v128, %v127
  %v168 = vpack.c.b16 %v130, %v129
  %v169 = vpack.c.b16 %v132, %v131
  %v170 = vpack.c.b16 %v134, %v133
  %v171 = vpack.c.b16 %v136, %v135
  %v172 = vpack.c.b16 %v138, %v137
  %v173 = vpack.c.b16 %v140, %v139
  %v174 = vpack.c.b16 %v142, %v141
  %v175 = vpack.c.b16 %v144, %v143
  %v176 = vpack.c.b16 %v146, %v145
  %v177 = vpack.c.b16 %v148, %v147
  %v178 = vpack.c.b16 %v150, %v149
  %v179 = vpack.c.b16 %v152, %v151
  %v180 = vpack.c.b16 %v154, %v153
  %v181 = vpack.c.b16 %v156, %v155
  %v182 = vpack.c.b16 %v158, %v157
  %v183 = vpack.c.b16 %v160, %v159
  %v184 = vpack.c.b16 %v162, %v161
  %v185 = vpack.c.b16 %v164, %v163
  %v186 = vpack.c.b16 %v166, %v165
  %vm207 = vcmask 523264
  %v209 = vsel %vm207, %v84, 0
  %211 = vmatprep.subr.bf16.mxu0 0
  %212 = vmatpush1.bf16.msra.mxu0 %v167
  %213 = vmatprep.subr.bf16.mxu0 0
  %214 = vmatpush1.bf16.msra.mxu0 %v168
  %215 = vmatprep.subr.bf16.mxu0 0
  %216 = vmatpush1.bf16.msra.mxu0 %v169
  %217 = vmatprep.subr.bf16.mxu0 0
  %218 = vmatpush1.bf16.msra.mxu0 %v170
  %219 = vmatprep.subr.bf16.mxu0 0
  %220 = vmatpush1.bf16.msra.mxu0 %v171
  %221 = vmatprep.subr.bf16.mxu0 0
  %222 = vmatpush1.bf16.msra.mxu0 %v172
  %223 = vmatprep.subr.bf16.mxu0 0
  %224 = vmatpush1.bf16.msra.mxu0 %v173
  %225 = vmatprep.subr.bf16.mxu0 0
  %226 = vmatpush1.bf16.msra.mxu0 %v174
  %227 = vmatprep.subr.bf16.mxu0 0
  %228 = vmatpush1.bf16.msra.mxu0 %v175
  %229 = vmatprep.subr.bf16.mxu0 0
  %230 = vmatpush1.bf16.msra.mxu0 %v176
  %231 = vmatprep.subr.bf16.mxu0 0
  %232 = vmatpush1.bf16.msra.mxu0 %v177
  %233 = vmatprep.subr.bf16.mxu0 0
  %234 = vmatpush1.bf16.msra.mxu0 %v178
  %235 = vmatprep.subr.bf16.mxu0 0
  %236 = vmatpush1.bf16.msra.mxu0 %v179
  %237 = vmatprep.subr.bf16.mxu0 0
  %238 = vmatpush1.bf16.msra.mxu0 %v180
  %239 = vmatprep.subr.bf16.mxu0 0
  %240 = vmatpush1.bf16.msra.mxu0 %v181
  %241 = vmatprep.subr.bf16.mxu0 0
  %242 = vmatpush1.bf16.msra.mxu0 %v182
  %243 = vmatprep.mubr.bf16.mxu0 %v83
  %244 = vmatmul.mubr.bf16.gmra.mrb[0].mxu0 %v82
  %v245 = vpop.f32.mrb[0].mxu0
  %v246 = vadd.f32 %v70, %v245
  %v247 = vpop.f32.mrb[0].mxu0
  %v248 = vpop.f32.mrb[0].mxu0
  %v249 = vadd.f32 %v70, %v248
  %v250 = vpop.f32.mrb[0].mxu0
  %251 = vdwg.mxu0
  %252 = vmatprep.subr.bf16.mxu0 0
  %253 = vmatpush1.bf16.msra.mxu0 %v183
  %254 = vmatprep.subr.bf16.mxu0 0
  %255 = vmatpush1.bf16.msra.mxu0 %v184
  %256 = vmatprep.subr.bf16.mxu0 0
  %257 = vmatpush1.bf16.msra.mxu0 %v185
  %258 = vmatprep.subr.bf16.mxu0 0
  %259 = vmatpush1.bf16.msra.mxu0 %v186
  %260 = vmatprep.subr.bf16.mxu0 0
  %261 = vmatpush1.bf16.msra.mxu0 0
  %262 = vmatprep.subr.bf16.mxu0 0
  %263 = vmatpush1.bf16.msra.mxu0 0
  %264 = vmatprep.subr.bf16.mxu0 0
  %265 = vmatpush1.bf16.msra.mxu0 0
  %266 = vmatprep.subr.bf16.mxu0 0
  %267 = vmatpush1.bf16.msra.mxu0 0
  %268 = vmatprep.subr.bf16.mxu0 0
  %269 = vmatpush1.bf16.msra.mxu0 0
  %270 = vmatprep.subr.bf16.mxu0 0
  %271 = vmatpush1.bf16.msra.mxu0 0
  %272 = vmatprep.subr.bf16.mxu0 0
  %273 = vmatpush1.bf16.msra.mxu0 0
  %274 = vmatprep.subr.bf16.mxu0 0
  %275 = vmatpush1.bf16.msra.mxu0 0
  %276 = vmatprep.subr.bf16.mxu0 0
  %277 = vmatpush1.bf16.msra.mxu0 0
  %278 = vmatprep.subr.bf16.mxu0 0
  %279 = vmatpush1.bf16.msra.mxu0 0
  %280 = vmatprep.subr.bf16.mxu0 0
  %281 = vmatpush1.bf16.msra.mxu0 0
  %282 = vmatprep.subr.bf16.mxu0 0
  %283 = vmatpush1.bf16.msra.mxu0 0
  %284 = vmatprep.mubr.bf16.mxu0 0
  %285 = vmatmul.mubr.bf16.gmra.mrb[0].mxu0 %v209
  %v286 = vpop.f32.mrb[0].mxu0
  %v287 = vadd.f32 %v246, %v286
  %v288 = vpop.f32.mrb[0].mxu0
  %v289 = vpop.f32.mrb[0].mxu0
  %v290 = vadd.f32 %v249, %v289
  %v291 = vpop.f32.mrb[0].mxu0
  %292 = vdwg.mxu0
  %v293 = vmax.f32 %v287, 0.0
  %v294 = vmax.f32 %v290, 0.0
  %v295 = vpack.c.bf16 %v294, %v293
  %v296 = vld [vmem:[%s3] sm:$0xf]
  %v297 = vld [vmem:[%s3 + $0x4] sm:$0xf]
  %v298 = vld [vmem:[%s3 + $0x8] sm:$0xf]
  %v299 = vld [vmem:[%s3 + $0xc] sm:$0xf]
  %v300 = vld [vmem:[%s3 + $0x10] sm:$0xf]
  %v301 = vld [vmem:[%s3 + $0x14] sm:$0xf]
  %v302 = vld [vmem:[%s3 + $0x18] sm:$0xf]
  %v303 = vld [vmem:[%s3 + $0x1c] sm:$0xf]
  %v304 = vld [vmem:[%s3 + $0x20] sm:$0xf]
  %v305 = vld [vmem:[%s3 + $0x24] sm:$0xf]
  %v306 = vld [vmem:[%s3 + $0x28] sm:$0xf]
  %v307 = vld [vmem:[%s3 + $0x2c] sm:$0xf]
  %v308 = vld [vmem:[%s3 + $0x30] sm:$0xf]
  %v309 = vld [vmem:[%s3 + $0x34] sm:$0xf]
  %v310 = vld [vmem:[%s3 + $0x38] sm:$0xf]
  %v311 = vld [vmem:[%s3 + $0x3c] sm:$0xf]
  %v312 = vld [vmem:[%s4] sm:$0x1]
  %v314 = vlaneseq
  %v315 = vshrl.u32 %v314, 7
  %v316 = vsub.s32 0, %v315
  %v317 = vrot.slane %v312, %v316
  %v335 = vunpack.c.l.b16 %v296
  %v336 = vunpack.c.l.b16 %v297
  %v337 = vunpack.c.l.b16 %v298
  %v338 = vunpack.c.l.b16 %v299
  %v339 = vunpack.c.l.b16 %v300
  %v340 = vunpack.c.l.b16 %v301
  %v341 = vunpack.c.l.b16 %v302
  %v342 = vunpack.c.l.b16 %v303
  %v343 = vunpack.c.l.b16 %v304
  %v344 = vunpack.c.l.b16 %v305
  %v345 = vunpack.c.l.b16 %v306
  %v346 = vunpack.c.l.b16 %v307
  %v347 = vunpack.c.l.b16 %v308
  %v348 = vunpack.c.l.b16 %v309
  %v349 = vunpack.c.l.b16 %v310
  %v350 = vunpack.c.l.b16 %v311
  %v351 = vpack.c.b16 %v336, %v335
  %v352 = vpack.c.b16 %v338, %v337
  %v353 = vpack.c.b16 %v340, %v339
  %v354 = vpack.c.b16 %v342, %v341
  %v355 = vpack.c.b16 %v344, %v343
  %v356 = vpack.c.b16 %v346, %v345
  %v357 = vpack.c.b16 %v348, %v347
  %v358 = vpack.c.b16 %v350, %v349
  %367 = vmatprep.subr.bf16.mxu0 0
  %368 = vmatpush1.bf16.msra.mxu0 %v351
  %369 = vmatprep.subr.bf16.mxu0 0
  %370 = vmatpush1.bf16.msra.mxu0 %v352
  %371 = vmatprep.subr.bf16.mxu0 0
  %372 = vmatpush1.bf16.msra.mxu0 %v353
  %373 = vmatprep.subr.bf16.mxu0 0
  %374 = vmatpush1.bf16.msra.mxu0 %v354
  %375 = vmatprep.subr.bf16.mxu0 0
  %376 = vmatpush1.bf16.msra.mxu0 %v355
  %377 = vmatprep.subr.bf16.mxu0 0
  %378 = vmatpush1.bf16.msra.mxu0 %v356
  %379 = vmatprep.subr.bf16.mxu0 0
  %380 = vmatpush1.bf16.msra.mxu0 %v357
  %381 = vmatprep.subr.bf16.mxu0 0
  %382 = vmatpush1.bf16.msra.mxu0 %v358
  %383 = vmatprep.subr.bf16.mxu0 0
  %384 = vmatpush1.bf16.msra.mxu0 0
  %385 = vmatprep.subr.bf16.mxu0 0
  %386 = vmatpush1.bf16.msra.mxu0 0
  %387 = vmatprep.subr.bf16.mxu0 0
  %388 = vmatpush1.bf16.msra.mxu0 0
  %389 = vmatprep.subr.bf16.mxu0 0
  %390 = vmatpush1.bf16.msra.mxu0 0
  %391 = vmatprep.subr.bf16.mxu0 0
  %392 = vmatpush1.bf16.msra.mxu0 0
  %393 = vmatprep.subr.bf16.mxu0 0
  %394 = vmatpush1.bf16.msra.mxu0 0
  %395 = vmatprep.subr.bf16.mxu0 0
  %396 = vmatpush1.bf16.msra.mxu0 0
  %397 = vmatprep.subr.bf16.mxu0 0
  %398 = vmatpush1.bf16.msra.mxu0 0
  %399 = vmatprep.mubr.bf16.mxu0 0
  %400 = vmatmul.mubr.bf16.gmra.mrb[0].mxu0 %v295
  %v401 = vpop.f32.mrb[0].mxu0
  %v402 = vadd.f32 %v317, %v401
  %v403 = vpop.f32.mrb[0].mxu0
  %v404 = vpop.f32.mrb[0].mxu0
  %v405 = vadd.f32 %v317, %v404
  %v406 = vpop.f32.mrb[0].mxu0
  %407 = vdwg.mxu0
  %v408 = vlaneseq
  %v409 = vand.u32 %v408, 127
  %vm410 = vcmp.lt.s32.totalorder %v409, 10
  %v411 = vsel %vm410, %v402, -1e+30
  %v412 = vsel %vm410, %v405, -1e+30
  %413 = vmax.xlane.f32.xlu0 %v411
  %v414 = vpop.xlane.xlu0 %413
  %415 = vmax.xlane.f32.xlu0 %v412
  %v416 = vpop.xlane.xlu0 %415
  %v417 = vsub.f32 %v411, %v414
  %v418 = vsub.f32 %v412, %v416
  %v419 = vmul.f32 %v417, 1.442695
  %v420 = vpow.pop %v419
  %v421 = vmul.f32 %v418, 1.442695
  %v422 = vpow.pop %v421
  %423 = vadd.xlane.f32.xlu0 %v420
  %v424 = vpop.xlane.xlu0 %423
  %425 = vadd.xlane.f32.xlu0 %v422
  %v426 = vpop.xlane.xlu0 %425
  %v427 = vlog2.pop %v424
  %v428 = vmul.f32 %v427, 0.6931472
  %v429 = vlog2.pop %v426
  %v430 = vmul.f32 %v429, 0.6931472
  %v431 = vadd.f32 %v428, %v414
  %v432 = vadd.f32 %v430, %v416
  %v433 = vsub.f32 %v411, %v431
  %v434 = vsub.f32 %v412, %v432
  %435 = vst [vmem:[%s5] sm:$0xff] %v433
  %436 = vst [vmem:[%s5 + $0x8] sm:$0xff] %v434
  // Predicated region
  $region22: #{mnist_net_forward.5} parent=0 // pred_check
    _
  $region23: #{mnist_net_forward.5} parent=0 // pred_check_branch
    %438 = sbr.rel (0) target = $region25
  $region24: #{mnist_net_forward.5} parent=0 // pred_region
    _
  $region25: #{mnist_net_forward.5} parent=0 // pred_fallthru
    _
  // Predicated region
  $region26: #{mnist_net_forward.5} parent=0 // pred_check
    _
  $region27: #{mnist_net_forward.5} parent=0 // pred_check_branch
    %440 = sbr.rel (0) target = $region29
  $region28: #{mnist_net_forward.5} parent=0 // pred_region
    _
  $region29: #{mnist_net_forward.5} parent=0 // pred_fallthru
    _

</llo_original>
